<compile_context>
chip_gen: v7x
topology: tpu7x:2x2x1
jax: 0.10.0
libtpu: 0.0.40
codegen_flags: <defaults>
</compile_context>

<pallas_src>
import functools

import jax
import jax.numpy as jnp
from jax.experimental import pallas as pl
from jax.experimental.pallas import tpu as pltpu

EPS = 1e-5
LANE = 128          # lane width: channel dim is padded to a multiple of this
ROW_CAP = 256       # target flattened rows (sublane dim) per tile


# ----------------------------------------------------------------------------
# Small helpers
# ----------------------------------------------------------------------------
def _round_up(x, m):
    return (x + m - 1) // m * m


def _pick_div(n, cap):
    """Largest divisor of n that is <= cap (>=1)."""
    cap = max(1, min(n, cap))
    for d in range(cap, 0, -1):
        if n % d == 0:
            return d
    return n


def _pick_row_tile(r, cap=ROW_CAP):
    """Row-tile size: divisor of r, multiple of 8 (sublane), <= cap; else full r."""
    if r <= cap:
        return r
    for d in range(cap - cap % 8, 0, -8):
        if r % d == 0:
            return d
    return r


def _cparams(*sem):
    return pltpu.CompilerParams(
        dimension_semantics=sem,
        vmem_limit_bytes=48 * 1024 * 1024,   # safe on v5e/v6e (128 MiB) and v7x (64 MiB)
    )


# ----------------------------------------------------------------------------
# Kernels
# ----------------------------------------------------------------------------
def _conv3x3_kernel(x_ref, w_ref, o_ref, st_ref, *, TH, TH_in, Wout, stride, cin, cp):
    """3x3 conv (input already zero-padded) for one (image, height-tile) grid step.

    x_ref : (1, Hp, Wp, cin)  full padded image (VMEM-resident, auto-pipelined)
    w_ref : (9*cin, cp)       im2col weight matrix (Cout padded to cp)
    o_ref : (1, TH, Wout, cp) raw conv output tile (f32)
    st_ref: (1, 1, 2, cp)     per-tile channel (sum, sum_of_squares)
    """
    ht = pl.program_id(1)
    row0 = pl.multiple_of(ht * (TH * stride), TH * stride)
    slab = x_ref[0, pl.ds(row0, TH_in), :, :].astype(jnp.float32)   # (TH_in, Wp, cin)

    # im2col: one (rows, 9*cin) patch -> single MXU matmul (instead of 9 K=cin dots).
    cols = []
    for dy in range(3):
        for dx in range(3):
            tap = slab[dy:dy + (TH - 1) * stride + 1:stride,
                       dx:dx + (Wout - 1) * stride + 1:stride, :]    # (TH, Wout, cin)
            cols.append(tap.reshape(TH * Wout, cin))
    patch = jnp.concatenate(cols, axis=1)                            # (TH*Wout, 9*cin)

    acc = jnp.dot(patch, w_ref[...], preferred_element_type=jnp.float32)  # (rows, cp)
    o_ref[...] = acc.reshape(1, TH, Wout, cp)

    s = jnp.sum(acc, axis=0, keepdims=True)
    ss = jnp.sum(acc * acc, axis=0, keepdims=True)
    st_ref[...] = jnp.concatenate([s, ss], axis=0).reshape(1, 1, 2, cp)


def _conv1x1_kernel(x_ref, w_ref, o_ref, st_ref, *, cp):
    """1x1 conv (already strided rows) + per-tile channel stats."""
    acc = jnp.dot(x_ref[...].astype(jnp.float32), w_ref[...],
                  preferred_element_type=jnp.float32)                # (TR, cp)
    o_ref[...] = acc
    s = jnp.sum(acc, axis=0, keepdims=True)
    ss = jnp.sum(acc * acc, axis=0, keepdims=True)
    st_ref[...] = jnp.concatenate([s, ss], axis=0).reshape(1, 2, cp)


def _bn_relu_kernel(x_ref, sc_ref, sh_ref, o_ref):
    o_ref[...] = jnp.maximum(x_ref[...] * sc_ref[...] + sh_ref[...], 0.0)


def _bn_add_bn_relu_kernel(a_ref, sa_ref, fa_ref, b_ref, sb_ref, fb_ref, o_ref):
    y = a_ref[...] * sa_ref[...] + fa_ref[...]
    y = y + b_ref[...] * sb_ref[...] + fb_ref[...]
    o_ref[...] = jnp.maximum(y, 0.0)


# ----------------------------------------------------------------------------
# pallas_call wrappers
# ----------------------------------------------------------------------------
def conv3x3_raw(x_nhwc, w_mat, *, stride):
    """3x3 conv, pad=1, given stride.  Returns (raw f32 output (N,Ho,Wo,Cp), per-tile stats)."""
    N, H, W, Cin = x_nhwc.shape
    K, Cp = w_mat.shape
    assert K == 9 * Cin
    Hout = (H - 1) // stride + 1
    Wout = (W - 1) // stride + 1
    TH = _pick_div(Hout, max(1, ROW_CAP // Wout))
    HT = Hout // TH
    TH_in = (TH - 1) * stride + 3

    xp = jnp.pad(x_nhwc, ((0, 0), (1, 1), (1, 1), (0, 0)))
    Hp, Wp = H + 2, W + 2

    kern = functools.partial(_conv3x3_kernel, TH=TH, TH_in=TH_in, Wout=Wout,
                             stride=stride, cin=Cin, cp=Cp)
    out, stats = pl.pallas_call(
        kern,
        grid=(N, HT),
        in_specs=[
            pl.BlockSpec((1, Hp, Wp, Cin), lambda n, h: (n, 0, 0, 0)),
            pl.BlockSpec((K, Cp), lambda n, h: (0, 0)),
        ],
        out_specs=(
            pl.BlockSpec((1, TH, Wout, Cp), lambda n, h: (n, h, 0, 0)),
            pl.BlockSpec((1, 1, 2, Cp), lambda n, h: (n, h, 0, 0)),
        ),
        out_shape=(
            jax.ShapeDtypeStruct((N, Hout, Wout, Cp), jnp.float32),
            jax.ShapeDtypeStruct((N, HT, 2, Cp), jnp.float32),
        ),
        compiler_params=_cparams("parallel", "parallel"),
    )(xp, w_mat)
    return out, stats


def conv1x1_raw(x_rows, w_mat):
    """Projection shortcut conv (rows already strided/flattened)."""
    R, Cin = x_rows.shape
    _, Cp = w_mat.shape
    TR = _pick_row_tile(R)
    RT = R // TR
    kern = functools.partial(_conv1x1_kernel, cp=Cp)
    out, stats = pl.pallas_call(
        kern,
        grid=(RT,),
        in_specs=[
            pl.BlockSpec((TR, Cin), lambda i: (i, 0)),
            pl.BlockSpec((Cin, Cp), lambda i: (0, 0)),
        ],
        out_specs=(
            pl.BlockSpec((TR, Cp), lambda i: (i, 0)),
            pl.BlockSpec((1, 2, Cp), lambda i: (i, 0, 0)),
        ),
        out_shape=(
            jax.ShapeDtypeStruct((R, Cp), jnp.float32),
            jax.ShapeDtypeStruct((RT, 2, Cp), jnp.float32),
        ),
        compiler_params=_cparams("parallel"),
    )(x_rows, w_mat)
    return out, stats


def bn_relu(x_rows, scale, shift):
    R, Cp = x_rows.shape
    TR = _pick_row_tile(R)
    return pl.pallas_call(
        _bn_relu_kernel,
        grid=(R // TR,),
        in_specs=[pl.BlockSpec((TR, Cp), lambda i: (i, 0)),
                  pl.BlockSpec((1, Cp), lambda i: (0, 0)),
                  pl.BlockSpec((1, Cp), lambda i: (0, 0))],
        out_specs=pl.BlockSpec((TR, Cp), lambda i: (i, 0)),
        out_shape=jax.ShapeDtypeStruct((R, Cp), jnp.float32),
        compiler_params=_cparams("parallel"),
    )(x_rows, scale, shift)


def bn_add_bn_relu(a, sa, fa, b, sb, fb):
    R, Cp = a.shape
    TR = _pick_row_tile(R)
    return pl.pallas_call(
        _bn_add_bn_relu_kernel,
        grid=(R // TR,),
        in_specs=[pl.BlockSpec((TR, Cp), lambda i: (i, 0)),
                  pl.BlockSpec((1, Cp), lambda i: (0, 0)),
                  pl.BlockSpec((1, Cp), lambda i: (0, 0)),
                  pl.BlockSpec((TR, Cp), lambda i: (i, 0)),
                  pl.BlockSpec((1, Cp), lambda i: (0, 0)),
                  pl.BlockSpec((1, Cp), lambda i: (0, 0))],
        out_specs=pl.BlockSpec((TR, Cp), lambda i: (i, 0)),
        out_shape=jax.ShapeDtypeStruct((R, Cp), jnp.float32),
        compiler_params=_cparams("parallel"),
    )(a, sa, fa, b, sb, fb)


# ----------------------------------------------------------------------------
# BN scale/shift from per-tile stats (tiny per-channel reduction, plain JAX)
# ----------------------------------------------------------------------------
def _bn_scale_shift(stats, gamma, beta, count, cp):
    flat = stats.reshape(-1, 2, cp)
    s = jnp.sum(flat[:, 0, :], axis=0)
    ss = jnp.sum(flat[:, 1, :], axis=0)
    mean = s / count
    var = jnp.maximum(ss / count - mean * mean, 0.0)
    cout = gamma.shape[0]
    g = jnp.pad(gamma.astype(jnp.float32), (0, cp - cout))
    b = jnp.pad(beta.astype(jnp.float32), (0, cp - cout))
    scale = g * jax.lax.rsqrt(var + EPS)
    shift = b - mean * scale
    return scale.reshape(1, cp), shift.reshape(1, cp)


# ----------------------------------------------------------------------------
# Weight re-layout (OIHW -> im2col matrices with lane-padded Cout / Cin)
# ----------------------------------------------------------------------------
def _w3x3_matrix(w_oihw, cin_p, cout_p):
    w = jnp.transpose(w_oihw, (2, 3, 1, 0))                # (3,3,Cin,Cout)
    _, _, ci, co = w.shape
    w = jnp.pad(w, ((0, 0), (0, 0), (0, cin_p - ci), (0, cout_p - co)))
    return w.reshape(9 * cin_p, cout_p).astype(jnp.float32)


def _w1x1_matrix(w_oihw, cout_p):
    co = w_oihw.shape[0]
    w = jnp.transpose(w_oihw[:, :, 0, 0], (1, 0))          # (Cin, Cout)
    return jnp.pad(w, ((0, 0), (0, cout_p - co))).astype(jnp.float32)


# ----------------------------------------------------------------------------
# BasicBlock module
# ----------------------------------------------------------------------------
class BasicBlockPallas:
    expansion = 1

    def __init__(self, in_planes, planes, stride=1, *, key):
        k = jax.random.split(key, 8)
        self.in_planes, self.planes, self.stride = in_planes, planes, stride
        fan1, fan2 = in_planes * 9, planes * 9
        self.w1 = jax.random.normal(k[0], (planes, in_planes, 3, 3), jnp.float32) * (2.0 / fan1) ** 0.5
        self.g1 = 1.0 + 0.1 * jax.random.normal(k[1], (planes,), jnp.float32)
        self.b1 = 0.1 * jax.random.normal(k[2], (planes,), jnp.float32)
        self.w2 = jax.random.normal(k[3], (planes, planes, 3, 3), jnp.float32) * (2.0 / fan2) ** 0.5
        self.g2 = 1.0 + 0.1 * jax.random.normal(k[4], (planes,), jnp.float32)
        self.b2 = 0.1 * jax.random.normal(k[5], (planes,), jnp.float32)
        self.has_proj = (stride != 1) or (in_planes != self.expansion * planes)
        if self.has_proj:
            self.ws = jax.random.normal(k[6], (self.expansion * planes, in_planes, 1, 1),
                                        jnp.float32) * (2.0 / in_planes) ** 0.5
            self.gs = 1.0 + 0.1 * jax.random.normal(k[7], (self.expansion * planes,), jnp.float32)
            self.bs = jnp.zeros((self.expansion * planes,), jnp.float32)

    def __call__(self, x_nchw):
        x = jnp.transpose(x_nchw, (0, 2, 3, 1))                    # NCHW -> NHWC
        N, H, W, Cin = x.shape
        planes, stride = self.planes, self.stride
        Cp = _round_up(planes, LANE)
        Hout = (H - 1) // stride + 1
        Wout = (W - 1) // stride + 1
        R = N * Hout * Wout

        # conv1 (raw, lane-dense) + fused per-tile BN stats
        c1, st1 = conv3x3_raw(x, _w3x3_matrix(self.w1, Cin, Cp), stride=stride)
        sc1, sh1 = _bn_scale_shift(st1, self.g1, self.b1, R, Cp)

        # bn1 + relu (tiled elementwise)
        h = bn_relu(c1.reshape(R, Cp), sc1, sh1).reshape(N, Hout, Wout, Cp)

        # conv2 (stride 1) + fused per-tile BN stats
        c2, st2 = conv3x3_raw(h, _w3x3_matrix(self.w2, Cp, Cp), stride=1)
        sc2, sh2 = _bn_scale_shift(st2, self.g2, self.b2, R, Cp)

        # shortcut branch: raw values plus its own BN affine
        if self.has_proj:
            xs = x[:, ::stride, ::stride, :].reshape(R, Cin)
            srw, sts = conv1x1_raw(xs, _w1x1_matrix(self.ws, Cp))
            scs, shs = _bn_scale_shift(sts, self.gs, self.bs, R, Cp)
        else:
            srw = jnp.pad(x, ((0, 0), (0, 0), (0, 0), (0, Cp - Cin))).reshape(R, Cp)
            scs = jnp.ones((1, Cp), jnp.float32)
            shs = jnp.zeros((1, Cp), jnp.float32)

        # bn2 + shortcut-BN + residual add + relu (single fused elementwise kernel)
        out = bn_add_bn_relu(c2.reshape(R, Cp), sc2, sh2, srw, scs, shs)
        out = out.reshape(N, Hout, Wout, Cp)[..., :planes]
        return jnp.transpose(out, (0, 3, 1, 2))                    # NHWC -> NCHW


# ----------------------------------------------------------------------------
# Pure-JAX reference (training-mode BatchNorm semantics, like the PyTorch block)
# ----------------------------------------------------------------------------
def _ref_block(block, x_nchw):
    def conv(x, w, stride, pad):
        return jax.lax.conv_general_dilated(
            x, w, (stride, stride), [(pad, pad), (pad, pad)],
            dimension_numbers=("NCHW", "OIHW", "NCHW"))

    def bn(x, g, b):
        mean = jnp.mean(x, axis=(0, 2, 3), keepdims=True)
        var = jnp.mean(jnp.square(x - mean), axis=(0, 2, 3), keepdims=True)
        return (x - mean) * jax.lax.rsqrt(var + EPS) * g.reshape(1, -1, 1, 1) + b.reshape(1, -1, 1, 1)

    out = jax.nn.relu(bn(conv(x_nchw, block.w1, block.stride, 1), block.g1, block.b1))
    out = bn(conv(out, block.w2, 1, 1), block.g2, block.b2)
    if block.has_proj:
        sc = bn(conv(x_nchw, block.ws, block.stride, 0), block.gs, block.bs)
    else:
        sc = x_nchw
    return jax.nn.relu(out + sc)


if __name__ == "__main__":
    key = jax.random.PRNGKey(0)
    kx, kb1, kb2, kb3 = jax.random.split(key, 4)

    # NCHW like PyTorch: (N=2, C=8, H=16, W=16).
    x = jax.random.normal(kx, (2, 8, 16, 16), jnp.float32)

    # Identity-shortcut block (stride=1, in_planes == planes).
    block1 = BasicBlockPallas(8, 8, stride=1, key=kb1)
    y1 = jax.block_until_ready(block1(x))
    r1 = jax.block_until_ready(_ref_block(block1, x))
    assert y1.shape == (2, 8, 16, 16)
    assert jnp.allclose(y1, r1, atol=2e-3, rtol=2e-3), "identity-block mismatch"

    # Projection-shortcut block (stride=2, channel expansion 8 -> 16).
    block2 = BasicBlockPallas(8, 16, stride=2, key=kb2)
    y2 = jax.block_until_ready(block2(x))
    r2 = jax.block_until_ready(_ref_block(block2, x))
    assert y2.shape == (2, 16, 8, 8)
    assert jnp.allclose(y2, r2, atol=2e-3, rtol=2e-3), "projection-block mismatch"

    # Larger spatial size so the conv grid has multiple height tiles per image
    # (exercises halo slabs and cross-tile BN statistics).
    x3 = jax.random.normal(kx, (2, 8, 32, 32), jnp.float32)
    block3 = BasicBlockPallas(8, 8, stride=1, key=kb3)
    y3 = jax.block_until_ready(block3(x3))
    r3 = jax.block_until_ready(_ref_block(block3, x3))
    assert y3.shape == (2, 8, 32, 32)
    assert jnp.allclose(y3, r3, atol=2e-3, rtol=2e-3), "multi-tile block mismatch"

    print("KERNEL_OK")
</pallas_src>

<mosaic_0001>
module attributes {stable_mosaic.version = 11 : i64} {
  func.func @_conv3x3_kernel(%arg0: i32, %arg1: i32, %arg2: memref<1x18x18x8xf32, #tpu.memory_space<vmem>>, %arg3: memref<72x128xf32, #tpu.memory_space<vmem>>, %arg4: memref<1x16x16x128xf32, #tpu.memory_space<vmem>>, %arg5: memref<1x1x2x128xf32, #tpu.memory_space<vmem>>) attributes {dimension_semantics = [#tpu.dimension_semantics<parallel>, #tpu.dimension_semantics<parallel>], iteration_bounds = array<i64: 2, 1>, scalar_prefetch = 0 : i64, scratch_operands = 0 : i64, tpu.core_type = #tpu.core_type<tc>, window_params = [{transform_indices = @transform_0, window_bounds = array<i64: 1, 18, 18, 8>}, {pipeline_mode = #tpu.pipeline_mode<synchronous>, transform_indices = @transform_1, window_bounds = array<i64: 72, 128>}, {transform_indices = @transform_2, window_bounds = array<i64: 1, 16, 16, 128>}, {transform_indices = @transform_3, window_bounds = array<i64: 1, 1, 2, 128>}]} {
    %c16_i32 = arith.constant 16 : i32
    %0 = arith.muli %arg1, %c16_i32 : i32
    %1 = tpu.assume_multiple %0, 16 : i32
    %c0 = arith.constant 0 : index
    %2 = arith.index_cast %1 : i32 to index
    %c0_0 = arith.constant 0 : index
    %c0_1 = arith.constant 0 : index
    %3 = vector.load %arg2[%c0, %2, %c0_0, %c0_1] : memref<1x18x18x8xf32, #tpu.memory_space<vmem>>, vector<1x18x18x8xf32>
    %4 = vector.shape_cast %3 : vector<1x18x18x8xf32> to vector<18x18x8xf32>
    %5 = vector.extract_strided_slice %4 {offsets = [0, 0, 0], sizes = [16, 16, 8], strides = [1, 1, 1]} : vector<18x18x8xf32> to vector<16x16x8xf32>
    %6 = vector.shape_cast %5 : vector<16x16x8xf32> to vector<256x8xf32>
    %7 = vector.extract_strided_slice %4 {offsets = [0, 1, 0], sizes = [16, 16, 8], strides = [1, 1, 1]} : vector<18x18x8xf32> to vector<16x16x8xf32>
    %8 = vector.shape_cast %7 : vector<16x16x8xf32> to vector<256x8xf32>
    %9 = vector.extract_strided_slice %4 {offsets = [0, 2, 0], sizes = [16, 16, 8], strides = [1, 1, 1]} : vector<18x18x8xf32> to vector<16x16x8xf32>
    %10 = vector.shape_cast %9 : vector<16x16x8xf32> to vector<256x8xf32>
    %11 = vector.extract_strided_slice %4 {offsets = [1, 0, 0], sizes = [16, 16, 8], strides = [1, 1, 1]} : vector<18x18x8xf32> to vector<16x16x8xf32>
    %12 = vector.shape_cast %11 : vector<16x16x8xf32> to vector<256x8xf32>
    %13 = vector.extract_strided_slice %4 {offsets = [1, 1, 0], sizes = [16, 16, 8], strides = [1, 1, 1]} : vector<18x18x8xf32> to vector<16x16x8xf32>
    %14 = vector.shape_cast %13 : vector<16x16x8xf32> to vector<256x8xf32>
    %15 = vector.extract_strided_slice %4 {offsets = [1, 2, 0], sizes = [16, 16, 8], strides = [1, 1, 1]} : vector<18x18x8xf32> to vector<16x16x8xf32>
    %16 = vector.shape_cast %15 : vector<16x16x8xf32> to vector<256x8xf32>
    %17 = vector.extract_strided_slice %4 {offsets = [2, 0, 0], sizes = [16, 16, 8], strides = [1, 1, 1]} : vector<18x18x8xf32> to vector<16x16x8xf32>
    %18 = vector.shape_cast %17 : vector<16x16x8xf32> to vector<256x8xf32>
    %19 = vector.extract_strided_slice %4 {offsets = [2, 1, 0], sizes = [16, 16, 8], strides = [1, 1, 1]} : vector<18x18x8xf32> to vector<16x16x8xf32>
    %20 = vector.shape_cast %19 : vector<16x16x8xf32> to vector<256x8xf32>
    %21 = vector.extract_strided_slice %4 {offsets = [2, 2, 0], sizes = [16, 16, 8], strides = [1, 1, 1]} : vector<18x18x8xf32> to vector<16x16x8xf32>
    %22 = vector.shape_cast %21 : vector<16x16x8xf32> to vector<256x8xf32>
    %23 = tpu.concatenate %6, %8, %10, %12, %14, %16, %18, %20, %22 in 1 : vector<256x8xf32>, vector<256x8xf32>, vector<256x8xf32>, vector<256x8xf32>, vector<256x8xf32>, vector<256x8xf32>, vector<256x8xf32>, vector<256x8xf32>, vector<256x8xf32> -> vector<256x72xf32>
    %c0_2 = arith.constant 0 : index
    %c0_3 = arith.constant 0 : index
    %24 = vector.load %arg3[%c0_2, %c0_3] : memref<72x128xf32, #tpu.memory_space<vmem>>, vector<72x128xf32>
    %cst = arith.constant dense<0.000000e+00> : vector<256x128xf32>
    %25 = tpu.matmul %23, %24, %cst {dimension_numbers = #tpu.dot_dimension_numbers<[1], [0], [0], [1], [0, 0, 1, 1], [], []>} : vector<256x72xf32>, vector<72x128xf32>, vector<256x128xf32> -> vector<256x128xf32>
    %26 = vector.shape_cast %25 : vector<256x128xf32> to vector<1x16x16x128xf32>
    %c0_4 = arith.constant 0 : index
    %c0_5 = arith.constant 0 : index
    %c0_6 = arith.constant 0 : index
    %c0_7 = arith.constant 0 : index
    %27 = vector.load %arg4[%c0_4, %c0_5, %c0_6, %c0_7] : memref<1x16x16x128xf32, #tpu.memory_space<vmem>>, vector<1x16x16x128xf32>
    tpu.vector_store %arg4[%c0_4, %c0_5, %c0_6, %c0_7], %26 {strides = array<i32>} : memref<1x16x16x128xf32, #tpu.memory_space<vmem>>, vector<1x16x16x128xf32>,
    %cst_8 = arith.constant dense<0.000000e+00> : vector<128xf32>
    %28 = vector.multi_reduction <add>, %25, %cst_8 [0] : vector<256x128xf32> to vector<128xf32>
    %29 = vector.shape_cast %28 : vector<128xf32> to vector<1x128xf32>
    %30 = arith.mulf %25, %25 : vector<256x128xf32>
    %cst_9 = arith.constant dense<0.000000e+00> : vector<128xf32>
    %31 = vector.multi_reduction <add>, %30, %cst_9 [0] : vector<256x128xf32> to vector<128xf32>
    %32 = vector.shape_cast %31 : vector<128xf32> to vector<1x128xf32>
    %33 = tpu.concatenate %29, %32 in 0 : vector<1x128xf32>, vector<1x128xf32> -> vector<2x128xf32>
    %34 = vector.shape_cast %33 : vector<2x128xf32> to vector<1x1x2x128xf32>
    %c0_10 = arith.constant 0 : index
    %c0_11 = arith.constant 0 : index
    %c0_12 = arith.constant 0 : index
    %c0_13 = arith.constant 0 : index
    %35 = vector.load %arg5[%c0_10, %c0_11, %c0_12, %c0_13] : memref<1x1x2x128xf32, #tpu.memory_space<vmem>>, vector<1x1x2x128xf32>
    tpu.vector_store %arg5[%c0_10, %c0_11, %c0_12, %c0_13], %34 {strides = array<i32>} : memref<1x1x2x128xf32, #tpu.memory_space<vmem>>, vector<1x1x2x128xf32>,
    return
  }
  func.func @transform_0(%arg0: i32, %arg1: i32) -> (i32, i32, i32, i32) {
    %c0_i32 = arith.constant 0 : i32
    %c0_i32_0 = arith.constant 0 : i32
    %c0_i32_1 = arith.constant 0 : i32
    %c0_i32_2 = arith.constant 0 : i32
    return %arg0, %c0_i32, %c0_i32_0, %c0_i32_1 : i32, i32, i32, i32
  }
  func.func @transform_1(%arg0: i32, %arg1: i32) -> (i32, i32) {
    %c0_i32 = arith.constant 0 : i32
    %c0_i32_0 = arith.constant 0 : i32
    %c0_i32_1 = arith.constant 0 : i32
    return %c0_i32, %c0_i32_0 : i32, i32
  }
  func.func @transform_2(%arg0: i32, %arg1: i32) -> (i32, i32, i32, i32) {
    %c0_i32 = arith.constant 0 : i32
    %c0_i32_0 = arith.constant 0 : i32
    %c0_i32_1 = arith.constant 0 : i32
    return %arg0, %arg1, %c0_i32, %c0_i32_0 : i32, i32, i32, i32
  }
  func.func @transform_3(%arg0: i32, %arg1: i32) -> (i32, i32, i32, i32) {
    %c0_i32 = arith.constant 0 : i32
    %c0_i32_0 = arith.constant 0 : i32
    %c0_i32_1 = arith.constant 0 : i32
    return %arg0, %arg1, %c0_i32, %c0_i32_0 : i32, i32, i32, i32
  }
}

</mosaic_0001>

<llo_original>
// kernel: tpu_custom_call.1
$region0: #{tpu_custom_call.1}
  #allocation0 [shape = 'u32[]', space=smem, size = 0x4, offset = 0x4, fixed_abs, tag = 'smem constant byte address 0x4 - core index']
  #allocation1 [shape = 'u32[144,128]{1,0:T(1,128)}', space=vmem, size = 0x12000, scoped, tag = 'internal scratch']
  %s0 = inlined_call_operand.vmem [shape: f32[2,18,18,8], index: 0, kind: input, shape index: {}]
  %s1 = inlined_call_operand.vmem [shape: f32[72,128], index: 1, kind: input, shape index: {}]
  %s2 = inlined_call_operand.hbm [shape: f32[2,16,16,128], index: 2, kind: output, shape index: {0}]
  %s3 = inlined_call_operand.hbm [shape: f32[2,1,2,128], index: 3, kind: output, shape index: {1}]
  %4 = xla_tuple %s2, %s3
  %s5 = sld [smem:[#allocation0]]
  $region49: #{tpu_custom_call.1} parent=0
    _
  %s7 = ssub.s32 1, %s5
  %s8 = scalar_select 0, %s7, %s5
  $region1: #{tpu_custom_call.1} parent=0
    #allocation2 [shape = 'u8[262144]{0}', space=vmem, size = 0x40000, scoped, tag = 'output window, operand 0']
    #allocation3 [shape = 's32[2]{0}', space=sflag, size = 0x8, scoped, tag = 'scoped memory for tpu_custom_call.1']
    #allocation4 [shape = 'u8[2048]{0}', space=vmem, size = 0x800, scoped, tag = 'output window, operand 1']
    #allocation5 [shape = 's32[2]{0}', space=sflag, size = 0x8, scoped, tag = 'scoped memory for tpu_custom_call.1']
    %9 = vsyncpa [#allocation3], 0
    %s10 = scalar_lea.sflag [#allocation3], 1
    %11 = vsyncpa %s10, 0
    %12 = vsyncpa [#allocation5], 0
    %s13 = scalar_lea.sflag [#allocation5], 1
    %14 = vsyncpa %s13, 0
    loop: start=0, step=1, limit=4
    $region2: #{tpu_custom_call.1} parent=1 // loop_pre_header
      _
    $region3: #{tpu_custom_call.1} parent=1 // loop_header
      %s16 = sphi 0, %s20
      %p17 = scmp.ge.s32.totalorder %s16, 4
      %s23 = sphi 0, %s35
      %s24 = sphi 0, %s31
      %s25 = sphi 0, %s23
      %s26 = sphi 0, %s24
      %s27 = sphi 0, %s25
      %s28 = sphi 0, %s26
      %s38 = sphi 0, %s40
      %s41 = sphi 0, %s38
      %s42 = sphi 0, %s41
      %s58 = sphi 0, %s42
      %s62 = sphi 0, %s62
      %s64 = sphi 0, %s62
      %s65 = sphi 0, %s64
      %s79 = sphi 0, %s65
      %s87 = sphi 0, %s89
      %s90 = sphi 0, %s87
      %s91 = sphi 0, %s90
      %s107 = sphi 0, %s91
      %s115 = sphi 0, %s117
      %s118 = sphi 0, %s115
      %s119 = sphi 0, %s118
      %s135 = sphi 0, %s119
    $region4: #{tpu_custom_call.1} parent=1 // loop_header_branch
      %19 = sbr.rel (%p17) target = $region8
    $region5: #{tpu_custom_call.1} parent=1 // loop_body
      %s21 = ssub.s32 %s16, 1
      %s22 = ssub.s32 %s16, 2
      %s29 = sadd.s32 1, %s24
      %p30 = scmp.ge.s32.totalorder %s29, 1
      %s31 = scalar_select %p30, 0, %s29
      %s32 = sadd.s32 1, %s23
      %s33 = scalar_select %p30, %s32, %s23
      %p34 = scmp.ge.s32.totalorder %s33, 2
      %s35 = scalar_select %p34, 0, %s33
      %s36 = ssub.s32 %s23, %s35
      %p37 = scmp.eq.s32.totalorder %s36, 0
      %s39 = sadd.s32 %s38, 1
      %s40 = scalar_select %p37, %s38, %s39
      %p43 = pneg %p37
      %p44 = scmp.eq.s32.totalorder %s16, 1
      %p45 = por %p43, %p44
      %p46 = scmp.ne.s32.totalorder %s38, %s41
      %p47 = scmp.eq.s32.totalorder %s16, 0
      %p48 = por %p46, %p47
      %p49 = scmp.ne.s32.totalorder %s38, %s41
      %p50 = scmp.eq.s32.totalorder %s21, 1
      %p51 = por %p49, %p50
      %p52 = scmp.ne.s32.totalorder %s41, %s42
      %p53 = scmp.eq.s32.totalorder %s21, 0
      %p54 = por %p52, %p53
      %p55 = scmp.ne.s32.totalorder %s41, %s42
      %p56 = scmp.eq.s32.totalorder %s22, 1
      %p57 = por %p55, %p56
      %p59 = scmp.ne.s32.totalorder %s42, %s58
      %p60 = scmp.eq.s32.totalorder %s22, 0
      %p61 = por %p59, %p60
      %s63 = sadd.s32 %s62, 1
      %p66 = scmp.eq.s32.totalorder %s16, 1
      %p67 = scmp.ne.s32.totalorder %s62, %s64
      %p68 = scmp.eq.s32.totalorder %s16, 0
      %p69 = por %p67, %p68
      %p70 = scmp.ne.s32.totalorder %s62, %s64
      %p71 = scmp.eq.s32.totalorder %s21, 1
      %p72 = por %p70, %p71
      %p73 = scmp.ne.s32.totalorder %s64, %s65
      %p74 = scmp.eq.s32.totalorder %s21, 0
      %p75 = por %p73, %p74
      %p76 = scmp.ne.s32.totalorder %s64, %s65
      %p77 = scmp.eq.s32.totalorder %s22, 1
      %p78 = por %p76, %p77
      %p80 = scmp.ne.s32.totalorder %s65, %s79
      %p81 = scmp.eq.s32.totalorder %s22, 0
      %p82 = por %p80, %p81
      %s83 = ssub.s32 %s23, %s35
      %s84 = ssub.s32 %s24, %s31
      %s85 = sor.u32 %s83, %s84
      %p86 = scmp.eq.s32.totalorder %s85, 0
      %s88 = sadd.s32 %s87, 1
      %s89 = scalar_select %p86, %s87, %s88
      %p92 = pneg %p86
      %p93 = scmp.eq.s32.totalorder %s16, 1
      %p94 = por %p92, %p93
      %p95 = scmp.ne.s32.totalorder %s87, %s90
      %p96 = scmp.eq.s32.totalorder %s16, 0
      %p97 = por %p95, %p96
      %p98 = scmp.ne.s32.totalorder %s87, %s90
      %p99 = scmp.eq.s32.totalorder %s21, 1
      %p100 = por %p98, %p99
      %p101 = scmp.ne.s32.totalorder %s90, %s91
      %p102 = scmp.eq.s32.totalorder %s21, 0
      %p103 = por %p101, %p102
      %p104 = scmp.ne.s32.totalorder %s90, %s91
      %p105 = scmp.eq.s32.totalorder %s22, 1
      %p106 = por %p104, %p105
      %p108 = scmp.ne.s32.totalorder %s91, %s107
      %p109 = scmp.eq.s32.totalorder %s22, 0
      %p110 = por %p108, %p109
      %s111 = ssub.s32 %s23, %s35
      %s112 = ssub.s32 %s24, %s31
      %s113 = sor.u32 %s111, %s112
      %p114 = scmp.eq.s32.totalorder %s113, 0
      %s116 = sadd.s32 %s115, 1
      %s117 = scalar_select %p114, %s115, %s116
      %p120 = pneg %p114
      %p121 = scmp.eq.s32.totalorder %s16, 1
      %p122 = por %p120, %p121
      %p123 = scmp.ne.s32.totalorder %s115, %s118
      %p124 = scmp.eq.s32.totalorder %s16, 0
      %p125 = por %p123, %p124
      %p126 = scmp.ne.s32.totalorder %s115, %s118
      %p127 = scmp.eq.s32.totalorder %s21, 1
      %p128 = por %p126, %p127
      %p129 = scmp.ne.s32.totalorder %s118, %s119
      %p130 = scmp.eq.s32.totalorder %s21, 0
      %p131 = por %p129, %p130
      %p132 = scmp.ne.s32.totalorder %s118, %s119
      %p133 = scmp.eq.s32.totalorder %s22, 1
      %p134 = por %p132, %p133
      %p136 = scmp.ne.s32.totalorder %s119, %s135
      %p137 = scmp.eq.s32.totalorder %s22, 0
      %p138 = por %p136, %p137
      %p139 = scmp.le.s32.totalorder 1, %s16
      %p140 = scmp.lt.s32.totalorder %s16, 3
      %p141 = pnand %p139, %p140
      %p142 = pneg %p141
      // Predicated region
      $region9: #{tpu_custom_call.1} parent=5 // pred_check
        _
      $region10: #{tpu_custom_call.1} parent=5 // pred_check_branch
        %144 = sbr.rel (%p141) target = $region12
      $region11: #{tpu_custom_call.1} parent=5 // pred_region
        %s145 = ssub.s32 %s16, 1
        // Predicated region
        $region13: #{tpu_custom_call.1} parent=11 // pred_check
          %p146 = pneg %p75
        $region14: #{tpu_custom_call.1} parent=11 // pred_check_branch
          %148 = sbr.rel (%p146) target = $region16
        $region15: #{tpu_custom_call.1} parent=11 // pred_region
          _
        $region16: #{tpu_custom_call.1} parent=11 // pred_fallthru
          _
      $region12: #{tpu_custom_call.1} parent=5 // pred_fallthru
        _
      %p149 = scmp.lt.s32.totalorder %s16, 2
      // Predicated region
      $region17: #{tpu_custom_call.1} parent=5 // pred_check
        %p150 = pneg %p149
      $region18: #{tpu_custom_call.1} parent=5 // pred_check_branch
        %152 = sbr.rel (%p150) target = $region20
      $region19: #{tpu_custom_call.1} parent=5 // pred_region
        // Predicated region
        $region21: #{tpu_custom_call.1} parent=19 // pred_check
          %p153 = pneg %p48
        $region22: #{tpu_custom_call.1} parent=19 // pred_check_branch
          %155 = sbr.rel (%p153) target = $region24
        $region23: #{tpu_custom_call.1} parent=19 // pred_region
          %p156 = scmp.lt.s32.totalorder %s23, 1
          %s157 = scalar_select %p156, %s23, 1
          %s158 = smul.addr %s157, 54
          %s159 = smul.addr %s158, 8
          %s160 = scalar_lea.vmem %s0, %s159
        $region24: #{tpu_custom_call.1} parent=19 // pred_fallthru
          _
      $region20: #{tpu_custom_call.1} parent=5 // pred_fallthru
        _
      %p161 = scmp.le.s32.totalorder 1, %s16
      %p162 = scmp.lt.s32.totalorder %s16, 3
      %p163 = pnand %p161, %p162
      %p164 = pneg %p163
      // Predicated region
      $region25: #{tpu_custom_call.1} parent=5 // pred_check
        _
      $region26: #{tpu_custom_call.1} parent=5 // pred_check_branch
        %166 = sbr.rel (%p163) target = $region28
      $region27: #{tpu_custom_call.1} parent=5 // pred_region
        %s167 = ssub.s32 %s16, 1
        %p168 = scmp.lt.s32.totalorder %s25, 1
        %s169 = scalar_select %p168, %s25, 1
        %s170 = smul.addr %s169, 54
        %s171 = smul.addr %s170, 8
        %s172 = scalar_lea.vmem %s0, %s171
        %p173 = pneg %p54
        %p174 = pneg %p51
        %p175 = pneg %p75
        %p176 = pneg %p72
        %p177 = pneg %p103
        %p178 = pneg %p100
        %s179 = sand.u32 %s90, 1
        %s180 = scalar_lea.sflag [#allocation3], %s179
        %s181 = sand.u32 %s90, 1
        %s182 = smul.addr %s181, 256
        %s183 = scalar_lea.vmem [#allocation2], %s182
        %p184 = pneg %p131
        %p185 = pneg %p128
        %s186 = sand.u32 %s118, 1
        %s187 = scalar_lea.sflag [#allocation5], %s186
        %s188 = sand.u32 %s118, 1
        %s189 = smul.addr %s188, 2
        %s190 = scalar_lea.vmem [#allocation4], %s189
        %p191 = scmp.lt.s32.totalorder %s25, 1
        %s192 = scalar_select %p191, %s25, 1
        %s193 = smul.addr %s192, 54
        %s194 = smul.addr %s193, 8
        %s195 = scalar_lea.vmem %s0, %s194
        %s196 = smul.u32 16, %s26
        %s197 = smul.u32 %s26, 16
        %s198 = smul.u32 %s197, 24
        %s199 = scalar_lea.vmem %s195, %s198
        %v200 = vld [vmem:[%s199] sm:$0xff]
        %v201 = vld [vmem:[%s199 + $0x8] sm:$0xff]
        %v202 = vld [vmem:[%s199 + $0x10] sm:$0x3]
        %v203 = vld [vmem:[%s199 + $0x18] sm:$0xff]
        %v204 = vld [vmem:[%s199 + $0x20] sm:$0xff]
        %v205 = vld [vmem:[%s199 + $0x28] sm:$0x3]
        %v206 = vld [vmem:[%s199 + $0x30] sm:$0xff]
        %v207 = vld [vmem:[%s199 + $0x38] sm:$0xff]
        %v208 = vld [vmem:[%s199 + $0x40] sm:$0x3]
        %v209 = vld [vmem:[%s199 + $0x48] sm:$0xff]
        %v210 = vld [vmem:[%s199 + $0x50] sm:$0xff]
        %v211 = vld [vmem:[%s199 + $0x58] sm:$0x3]
        %v212 = vld [vmem:[%s199 + $0x60] sm:$0xff]
        %v213 = vld [vmem:[%s199 + $0x68] sm:$0xff]
        %v214 = vld [vmem:[%s199 + $0x70] sm:$0x3]
        %v215 = vld [vmem:[%s199 + $0x78] sm:$0xff]
        %v216 = vld [vmem:[%s199 + $0x80] sm:$0xff]
        %v217 = vld [vmem:[%s199 + $0x88] sm:$0x3]
        %v218 = vld [vmem:[%s199 + $0x90] sm:$0xff]
        %v219 = vld [vmem:[%s199 + $0x98] sm:$0xff]
        %v220 = vld [vmem:[%s199 + $0xa0] sm:$0x3]
        %v221 = vld [vmem:[%s199 + $0xa8] sm:$0xff]
        %v222 = vld [vmem:[%s199 + $0xb0] sm:$0xff]
        %v223 = vld [vmem:[%s199 + $0xb8] sm:$0x3]
        %v224 = vld [vmem:[%s199 + $0xc0] sm:$0xff]
        %v225 = vld [vmem:[%s199 + $0xc8] sm:$0xff]
        %v226 = vld [vmem:[%s199 + $0xd0] sm:$0x3]
        %v227 = vld [vmem:[%s199 + $0xd8] sm:$0xff]
        %v228 = vld [vmem:[%s199 + $0xe0] sm:$0xff]
        %v229 = vld [vmem:[%s199 + $0xe8] sm:$0x3]
        %v230 = vld [vmem:[%s199 + $0xf0] sm:$0xff]
        %v231 = vld [vmem:[%s199 + $0xf8] sm:$0xff]
        %v232 = vld [vmem:[%s199 + $0x100] sm:$0x3]
        %v233 = vld [vmem:[%s199 + $0x108] sm:$0xff]
        %v234 = vld [vmem:[%s199 + $0x110] sm:$0xff]
        %v235 = vld [vmem:[%s199 + $0x118] sm:$0x3]
        %v236 = vld [vmem:[%s199 + $0x120] sm:$0xff]
        %v237 = vld [vmem:[%s199 + $0x128] sm:$0xff]
        %v238 = vld [vmem:[%s199 + $0x130] sm:$0x3]
        %v239 = vld [vmem:[%s199 + $0x138] sm:$0xff]
        %v240 = vld [vmem:[%s199 + $0x140] sm:$0xff]
        %v241 = vld [vmem:[%s199 + $0x148] sm:$0x3]
        %v242 = vld [vmem:[%s199 + $0x150] sm:$0xff]
        %v243 = vld [vmem:[%s199 + $0x158] sm:$0xff]
        %v244 = vld [vmem:[%s199 + $0x160] sm:$0x3]
        %v245 = vld [vmem:[%s199 + $0x168] sm:$0xff]
        %v246 = vld [vmem:[%s199 + $0x170] sm:$0xff]
        %v247 = vld [vmem:[%s199 + $0x178] sm:$0x3]
        %v248 = vld [vmem:[%s199 + $0x180] sm:$0xff]
        %v249 = vld [vmem:[%s199 + $0x188] sm:$0xff]
        %v250 = vld [vmem:[%s199 + $0x190] sm:$0x3]
        %v251 = vld [vmem:[%s199 + $0x198] sm:$0xff]
        %v252 = vld [vmem:[%s199 + $0x1a0] sm:$0xff]
        %v253 = vld [vmem:[%s199 + $0x1a8] sm:$0x3]
        %vm302 = vcmask 1046528
        %v303 = vrot.slane %v200, 1
        %v304 = vrot.slane %v201, 1
        %v305 = vsel %vm302, %v303, %v304
        %v306 = vrot.slane %v202, 1
        %v307 = vsel %vm302, %v304, %v306
        %v308 = vrot.slane %v203, 1
        %v309 = vrot.slane %v204, 1
        %v310 = vsel %vm302, %v308, %v309
        %v311 = vrot.slane %v205, 1
        %v312 = vsel %vm302, %v309, %v311
        %v313 = vrot.slane %v206, 1
        %v314 = vrot.slane %v207, 1
        %v315 = vsel %vm302, %v313, %v314
        %v316 = vrot.slane %v208, 1
        %v317 = vsel %vm302, %v314, %v316
        %v318 = vrot.slane %v209, 1
        %v319 = vrot.slane %v210, 1
        %v320 = vsel %vm302, %v318, %v319
        %v321 = vrot.slane %v211, 1
        %v322 = vsel %vm302, %v319, %v321
        %v323 = vrot.slane %v212, 1
        %v324 = vrot.slane %v213, 1
        %v325 = vsel %vm302, %v323, %v324
        %v326 = vrot.slane %v214, 1
        %v327 = vsel %vm302, %v324, %v326
        %v328 = vrot.slane %v215, 1
        %v329 = vrot.slane %v216, 1
        %v330 = vsel %vm302, %v328, %v329
        %v331 = vrot.slane %v217, 1
        %v332 = vsel %vm302, %v329, %v331
        %v333 = vrot.slane %v218, 1
        %v334 = vrot.slane %v219, 1
        %v335 = vsel %vm302, %v333, %v334
        %v336 = vrot.slane %v220, 1
        %v337 = vsel %vm302, %v334, %v336
        %v338 = vrot.slane %v221, 1
        %v339 = vrot.slane %v222, 1
        %v340 = vsel %vm302, %v338, %v339
        %v341 = vrot.slane %v223, 1
        %v342 = vsel %vm302, %v339, %v341
        %v343 = vrot.slane %v224, 1
        %v344 = vrot.slane %v225, 1
        %v345 = vsel %vm302, %v343, %v344
        %v346 = vrot.slane %v226, 1
        %v347 = vsel %vm302, %v344, %v346
        %v348 = vrot.slane %v227, 1
        %v349 = vrot.slane %v228, 1
        %v350 = vsel %vm302, %v348, %v349
        %v351 = vrot.slane %v229, 1
        %v352 = vsel %vm302, %v349, %v351
        %v353 = vrot.slane %v230, 1
        %v354 = vrot.slane %v231, 1
        %v355 = vsel %vm302, %v353, %v354
        %v356 = vrot.slane %v232, 1
        %v357 = vsel %vm302, %v354, %v356
        %v358 = vrot.slane %v233, 1
        %v359 = vrot.slane %v234, 1
        %v360 = vsel %vm302, %v358, %v359
        %v361 = vrot.slane %v235, 1
        %v362 = vsel %vm302, %v359, %v361
        %v363 = vrot.slane %v236, 1
        %v364 = vrot.slane %v237, 1
        %v365 = vsel %vm302, %v363, %v364
        %v366 = vrot.slane %v238, 1
        %v367 = vsel %vm302, %v364, %v366
        %v368 = vrot.slane %v239, 1
        %v369 = vrot.slane %v240, 1
        %v370 = vsel %vm302, %v368, %v369
        %v371 = vrot.slane %v241, 1
        %v372 = vsel %vm302, %v369, %v371
        %v373 = vrot.slane %v242, 1
        %v374 = vrot.slane %v243, 1
        %v375 = vsel %vm302, %v373, %v374
        %v376 = vrot.slane %v244, 1
        %v377 = vsel %vm302, %v374, %v376
        %v378 = vrot.slane %v245, 1
        %v379 = vrot.slane %v246, 1
        %v380 = vsel %vm302, %v378, %v379
        %v381 = vrot.slane %v247, 1
        %v382 = vsel %vm302, %v379, %v381
        %vm383 = vcmask 1045504
        %v384 = vrot.slane %v200, 2
        %v385 = vrot.slane %v201, 2
        %v386 = vsel %vm383, %v384, %v385
        %v387 = vrot.slane %v202, 2
        %v388 = vsel %vm383, %v385, %v387
        %v389 = vrot.slane %v203, 2
        %v390 = vrot.slane %v204, 2
        %v391 = vsel %vm383, %v389, %v390
        %v392 = vrot.slane %v205, 2
        %v393 = vsel %vm383, %v390, %v392
        %v394 = vrot.slane %v206, 2
        %v395 = vrot.slane %v207, 2
        %v396 = vsel %vm383, %v394, %v395
        %v397 = vrot.slane %v208, 2
        %v398 = vsel %vm383, %v395, %v397
        %v399 = vrot.slane %v209, 2
        %v400 = vrot.slane %v210, 2
        %v401 = vsel %vm383, %v399, %v400
        %v402 = vrot.slane %v211, 2
        %v403 = vsel %vm383, %v400, %v402
        %v404 = vrot.slane %v212, 2
        %v405 = vrot.slane %v213, 2
        %v406 = vsel %vm383, %v404, %v405
        %v407 = vrot.slane %v214, 2
        %v408 = vsel %vm383, %v405, %v407
        %v409 = vrot.slane %v215, 2
        %v410 = vrot.slane %v216, 2
        %v411 = vsel %vm383, %v409, %v410
        %v412 = vrot.slane %v217, 2
        %v413 = vsel %vm383, %v410, %v412
        %v414 = vrot.slane %v218, 2
        %v415 = vrot.slane %v219, 2
        %v416 = vsel %vm383, %v414, %v415
        %v417 = vrot.slane %v220, 2
        %v418 = vsel %vm383, %v415, %v417
        %v419 = vrot.slane %v221, 2
        %v420 = vrot.slane %v222, 2
        %v421 = vsel %vm383, %v419, %v420
        %v422 = vrot.slane %v223, 2
        %v423 = vsel %vm383, %v420, %v422
        %v424 = vrot.slane %v224, 2
        %v425 = vrot.slane %v225, 2
        %v426 = vsel %vm383, %v424, %v425
        %v427 = vrot.slane %v226, 2
        %v428 = vsel %vm383, %v425, %v427
        %v429 = vrot.slane %v227, 2
        %v430 = vrot.slane %v228, 2
        %v431 = vsel %vm383, %v429, %v430
        %v432 = vrot.slane %v229, 2
        %v433 = vsel %vm383, %v430, %v432
        %v434 = vrot.slane %v230, 2
        %v435 = vrot.slane %v231, 2
        %v436 = vsel %vm383, %v434, %v435
        %v437 = vrot.slane %v232, 2
        %v438 = vsel %vm383, %v435, %v437
        %v439 = vrot.slane %v233, 2
        %v440 = vrot.slane %v234, 2
        %v441 = vsel %vm383, %v439, %v440
        %v442 = vrot.slane %v235, 2
        %v443 = vsel %vm383, %v440, %v442
        %v444 = vrot.slane %v236, 2
        %v445 = vrot.slane %v237, 2
        %v446 = vsel %vm383, %v444, %v445
        %v447 = vrot.slane %v238, 2
        %v448 = vsel %vm383, %v445, %v447
        %v449 = vrot.slane %v239, 2
        %v450 = vrot.slane %v240, 2
        %v451 = vsel %vm383, %v449, %v450
        %v452 = vrot.slane %v241, 2
        %v453 = vsel %vm383, %v450, %v452
        %v454 = vrot.slane %v242, 2
        %v455 = vrot.slane %v243, 2
        %v456 = vsel %vm383, %v454, %v455
        %v457 = vrot.slane %v244, 2
        %v458 = vsel %vm383, %v455, %v457
        %v459 = vrot.slane %v245, 2
        %v460 = vrot.slane %v246, 2
        %v461 = vsel %vm383, %v459, %v460
        %v462 = vrot.slane %v247, 2
        %v463 = vsel %vm383, %v460, %v462
        %v467 = vrot.slane %v248, 1
        %v468 = vrot.slane %v249, 1
        %v469 = vsel %vm302, %v467, %v468
        %v470 = vrot.slane %v250, 1
        %v471 = vsel %vm302, %v468, %v470
        %v472 = vrot.slane %v248, 2
        %v473 = vrot.slane %v249, 2
        %v474 = vsel %vm383, %v472, %v473
        %v475 = vrot.slane %v250, 2
        %v476 = vsel %vm383, %v473, %v475
        %v480 = vrot.slane %v251, 1
        %v481 = vrot.slane %v252, 1
        %v482 = vsel %vm302, %v480, %v481
        %v483 = vrot.slane %v253, 1
        %v484 = vsel %vm302, %v481, %v483
        %v485 = vrot.slane %v251, 2
        %v486 = vrot.slane %v252, 2
        %v487 = vsel %vm383, %v485, %v486
        %v488 = vrot.slane %v253, 2
        %v489 = vsel %vm383, %v486, %v488
        %490 = vrot.lane.b32.xlu0 %v305, 8
        %v491 = vpop.permute.xlu0 %490
        %492 = vrot.lane.b32.xlu0 %v307, 8
        %v493 = vpop.permute.xlu0 %492
        %494 = vrot.lane.b32.xlu0 %v310, 8
        %v495 = vpop.permute.xlu0 %494
        %496 = vrot.lane.b32.xlu0 %v312, 8
        %v497 = vpop.permute.xlu0 %496
        %498 = vrot.lane.b32.xlu0 %v315, 8
        %v499 = vpop.permute.xlu0 %498
        %500 = vrot.lane.b32.xlu0 %v317, 8
        %v501 = vpop.permute.xlu0 %500
        %502 = vrot.lane.b32.xlu0 %v320, 8
        %v503 = vpop.permute.xlu0 %502
        %504 = vrot.lane.b32.xlu0 %v322, 8
        %v505 = vpop.permute.xlu0 %504
        %506 = vrot.lane.b32.xlu0 %v325, 8
        %v507 = vpop.permute.xlu0 %506
        %508 = vrot.lane.b32.xlu0 %v327, 8
        %v509 = vpop.permute.xlu0 %508
        %510 = vrot.lane.b32.xlu0 %v330, 8
        %v511 = vpop.permute.xlu0 %510
        %512 = vrot.lane.b32.xlu0 %v332, 8
        %v513 = vpop.permute.xlu0 %512
        %514 = vrot.lane.b32.xlu0 %v335, 8
        %v515 = vpop.permute.xlu0 %514
        %516 = vrot.lane.b32.xlu0 %v337, 8
        %v517 = vpop.permute.xlu0 %516
        %518 = vrot.lane.b32.xlu0 %v340, 8
        %v519 = vpop.permute.xlu0 %518
        %520 = vrot.lane.b32.xlu0 %v342, 8
        %v521 = vpop.permute.xlu0 %520
        %522 = vrot.lane.b32.xlu0 %v345, 8
        %v523 = vpop.permute.xlu0 %522
        %524 = vrot.lane.b32.xlu0 %v347, 8
        %v525 = vpop.permute.xlu0 %524
        %526 = vrot.lane.b32.xlu0 %v350, 8
        %v527 = vpop.permute.xlu0 %526
        %528 = vrot.lane.b32.xlu0 %v352, 8
        %v529 = vpop.permute.xlu0 %528
        %530 = vrot.lane.b32.xlu0 %v355, 8
        %v531 = vpop.permute.xlu0 %530
        %532 = vrot.lane.b32.xlu0 %v357, 8
        %v533 = vpop.permute.xlu0 %532
        %534 = vrot.lane.b32.xlu0 %v360, 8
        %v535 = vpop.permute.xlu0 %534
        %536 = vrot.lane.b32.xlu0 %v362, 8
        %v537 = vpop.permute.xlu0 %536
        %538 = vrot.lane.b32.xlu0 %v365, 8
        %v539 = vpop.permute.xlu0 %538
        %540 = vrot.lane.b32.xlu0 %v367, 8
        %v541 = vpop.permute.xlu0 %540
        %542 = vrot.lane.b32.xlu0 %v370, 8
        %v543 = vpop.permute.xlu0 %542
        %544 = vrot.lane.b32.xlu0 %v372, 8
        %v545 = vpop.permute.xlu0 %544
        %546 = vrot.lane.b32.xlu0 %v375, 8
        %v547 = vpop.permute.xlu0 %546
        %548 = vrot.lane.b32.xlu0 %v377, 8
        %v549 = vpop.permute.xlu0 %548
        %550 = vrot.lane.b32.xlu0 %v380, 8
        %v551 = vpop.permute.xlu0 %550
        %552 = vrot.lane.b32.xlu0 %v382, 8
        %v553 = vpop.permute.xlu0 %552
        %586 = vrot.lane.b32.xlu0 %v386, 16
        %v587 = vpop.permute.xlu0 %586
        %588 = vrot.lane.b32.xlu0 %v388, 16
        %v589 = vpop.permute.xlu0 %588
        %590 = vrot.lane.b32.xlu0 %v391, 16
        %v591 = vpop.permute.xlu0 %590
        %592 = vrot.lane.b32.xlu0 %v393, 16
        %v593 = vpop.permute.xlu0 %592
        %594 = vrot.lane.b32.xlu0 %v396, 16
        %v595 = vpop.permute.xlu0 %594
        %596 = vrot.lane.b32.xlu0 %v398, 16
        %v597 = vpop.permute.xlu0 %596
        %598 = vrot.lane.b32.xlu0 %v401, 16
        %v599 = vpop.permute.xlu0 %598
        %600 = vrot.lane.b32.xlu0 %v403, 16
        %v601 = vpop.permute.xlu0 %600
        %602 = vrot.lane.b32.xlu0 %v406, 16
        %v603 = vpop.permute.xlu0 %602
        %604 = vrot.lane.b32.xlu0 %v408, 16
        %v605 = vpop.permute.xlu0 %604
        %606 = vrot.lane.b32.xlu0 %v411, 16
        %v607 = vpop.permute.xlu0 %606
        %608 = vrot.lane.b32.xlu0 %v413, 16
        %v609 = vpop.permute.xlu0 %608
        %610 = vrot.lane.b32.xlu0 %v416, 16
        %v611 = vpop.permute.xlu0 %610
        %612 = vrot.lane.b32.xlu0 %v418, 16
        %v613 = vpop.permute.xlu0 %612
        %614 = vrot.lane.b32.xlu0 %v421, 16
        %v615 = vpop.permute.xlu0 %614
        %616 = vrot.lane.b32.xlu0 %v423, 16
        %v617 = vpop.permute.xlu0 %616
        %618 = vrot.lane.b32.xlu0 %v426, 16
        %v619 = vpop.permute.xlu0 %618
        %620 = vrot.lane.b32.xlu0 %v428, 16
        %v621 = vpop.permute.xlu0 %620
        %622 = vrot.lane.b32.xlu0 %v431, 16
        %v623 = vpop.permute.xlu0 %622
        %624 = vrot.lane.b32.xlu0 %v433, 16
        %v625 = vpop.permute.xlu0 %624
        %626 = vrot.lane.b32.xlu0 %v436, 16
        %v627 = vpop.permute.xlu0 %626
        %628 = vrot.lane.b32.xlu0 %v438, 16
        %v629 = vpop.permute.xlu0 %628
        %630 = vrot.lane.b32.xlu0 %v441, 16
        %v631 = vpop.permute.xlu0 %630
        %632 = vrot.lane.b32.xlu0 %v443, 16
        %v633 = vpop.permute.xlu0 %632
        %634 = vrot.lane.b32.xlu0 %v446, 16
        %v635 = vpop.permute.xlu0 %634
        %636 = vrot.lane.b32.xlu0 %v448, 16
        %v637 = vpop.permute.xlu0 %636
        %638 = vrot.lane.b32.xlu0 %v451, 16
        %v639 = vpop.permute.xlu0 %638
        %640 = vrot.lane.b32.xlu0 %v453, 16
        %v641 = vpop.permute.xlu0 %640
        %642 = vrot.lane.b32.xlu0 %v456, 16
        %v643 = vpop.permute.xlu0 %642
        %644 = vrot.lane.b32.xlu0 %v458, 16
        %v645 = vpop.permute.xlu0 %644
        %646 = vrot.lane.b32.xlu0 %v461, 16
        %v647 = vpop.permute.xlu0 %646
        %648 = vrot.lane.b32.xlu0 %v463, 16
        %v649 = vpop.permute.xlu0 %648
        %682 = vrot.lane.b32.xlu0 %v203, 24
        %v683 = vpop.permute.xlu0 %682
        %684 = vrot.lane.b32.xlu0 %v204, 24
        %v685 = vpop.permute.xlu0 %684
        %686 = vrot.lane.b32.xlu0 %v206, 24
        %v687 = vpop.permute.xlu0 %686
        %688 = vrot.lane.b32.xlu0 %v207, 24
        %v689 = vpop.permute.xlu0 %688
        %690 = vrot.lane.b32.xlu0 %v209, 24
        %v691 = vpop.permute.xlu0 %690
        %692 = vrot.lane.b32.xlu0 %v210, 24
        %v693 = vpop.permute.xlu0 %692
        %694 = vrot.lane.b32.xlu0 %v212, 24
        %v695 = vpop.permute.xlu0 %694
        %696 = vrot.lane.b32.xlu0 %v213, 24
        %v697 = vpop.permute.xlu0 %696
        %698 = vrot.lane.b32.xlu0 %v215, 24
        %v699 = vpop.permute.xlu0 %698
        %700 = vrot.lane.b32.xlu0 %v216, 24
        %v701 = vpop.permute.xlu0 %700
        %702 = vrot.lane.b32.xlu0 %v218, 24
        %v703 = vpop.permute.xlu0 %702
        %704 = vrot.lane.b32.xlu0 %v219, 24
        %v705 = vpop.permute.xlu0 %704
        %706 = vrot.lane.b32.xlu0 %v221, 24
        %v707 = vpop.permute.xlu0 %706
        %708 = vrot.lane.b32.xlu0 %v222, 24
        %v709 = vpop.permute.xlu0 %708
        %710 = vrot.lane.b32.xlu0 %v224, 24
        %v711 = vpop.permute.xlu0 %710
        %712 = vrot.lane.b32.xlu0 %v225, 24
        %v713 = vpop.permute.xlu0 %712
        %714 = vrot.lane.b32.xlu0 %v227, 24
        %v715 = vpop.permute.xlu0 %714
        %716 = vrot.lane.b32.xlu0 %v228, 24
        %v717 = vpop.permute.xlu0 %716
        %718 = vrot.lane.b32.xlu0 %v230, 24
        %v719 = vpop.permute.xlu0 %718
        %720 = vrot.lane.b32.xlu0 %v231, 24
        %v721 = vpop.permute.xlu0 %720
        %722 = vrot.lane.b32.xlu0 %v233, 24
        %v723 = vpop.permute.xlu0 %722
        %724 = vrot.lane.b32.xlu0 %v234, 24
        %v725 = vpop.permute.xlu0 %724
        %726 = vrot.lane.b32.xlu0 %v236, 24
        %v727 = vpop.permute.xlu0 %726
        %728 = vrot.lane.b32.xlu0 %v237, 24
        %v729 = vpop.permute.xlu0 %728
        %730 = vrot.lane.b32.xlu0 %v239, 24
        %v731 = vpop.permute.xlu0 %730
        %732 = vrot.lane.b32.xlu0 %v240, 24
        %v733 = vpop.permute.xlu0 %732
        %734 = vrot.lane.b32.xlu0 %v242, 24
        %v735 = vpop.permute.xlu0 %734
        %736 = vrot.lane.b32.xlu0 %v243, 24
        %v737 = vpop.permute.xlu0 %736
        %738 = vrot.lane.b32.xlu0 %v245, 24
        %v739 = vpop.permute.xlu0 %738
        %740 = vrot.lane.b32.xlu0 %v246, 24
        %v741 = vpop.permute.xlu0 %740
        %742 = vrot.lane.b32.xlu0 %v248, 24
        %v743 = vpop.permute.xlu0 %742
        %744 = vrot.lane.b32.xlu0 %v249, 24
        %v745 = vpop.permute.xlu0 %744
        %778 = vrot.lane.b32.xlu0 %v310, 32
        %v779 = vpop.permute.xlu0 %778
        %780 = vrot.lane.b32.xlu0 %v312, 32
        %v781 = vpop.permute.xlu0 %780
        %782 = vrot.lane.b32.xlu0 %v315, 32
        %v783 = vpop.permute.xlu0 %782
        %784 = vrot.lane.b32.xlu0 %v317, 32
        %v785 = vpop.permute.xlu0 %784
        %786 = vrot.lane.b32.xlu0 %v320, 32
        %v787 = vpop.permute.xlu0 %786
        %788 = vrot.lane.b32.xlu0 %v322, 32
        %v789 = vpop.permute.xlu0 %788
        %790 = vrot.lane.b32.xlu0 %v325, 32
        %v791 = vpop.permute.xlu0 %790
        %792 = vrot.lane.b32.xlu0 %v327, 32
        %v793 = vpop.permute.xlu0 %792
        %794 = vrot.lane.b32.xlu0 %v330, 32
        %v795 = vpop.permute.xlu0 %794
        %796 = vrot.lane.b32.xlu0 %v332, 32
        %v797 = vpop.permute.xlu0 %796
        %798 = vrot.lane.b32.xlu0 %v335, 32
        %v799 = vpop.permute.xlu0 %798
        %800 = vrot.lane.b32.xlu0 %v337, 32
        %v801 = vpop.permute.xlu0 %800
        %802 = vrot.lane.b32.xlu0 %v340, 32
        %v803 = vpop.permute.xlu0 %802
        %804 = vrot.lane.b32.xlu0 %v342, 32
        %v805 = vpop.permute.xlu0 %804
        %806 = vrot.lane.b32.xlu0 %v345, 32
        %v807 = vpop.permute.xlu0 %806
        %808 = vrot.lane.b32.xlu0 %v347, 32
        %v809 = vpop.permute.xlu0 %808
        %810 = vrot.lane.b32.xlu0 %v350, 32
        %v811 = vpop.permute.xlu0 %810
        %812 = vrot.lane.b32.xlu0 %v352, 32
        %v813 = vpop.permute.xlu0 %812
        %814 = vrot.lane.b32.xlu0 %v355, 32
        %v815 = vpop.permute.xlu0 %814
        %816 = vrot.lane.b32.xlu0 %v357, 32
        %v817 = vpop.permute.xlu0 %816
        %818 = vrot.lane.b32.xlu0 %v360, 32
        %v819 = vpop.permute.xlu0 %818
        %820 = vrot.lane.b32.xlu0 %v362, 32
        %v821 = vpop.permute.xlu0 %820
        %822 = vrot.lane.b32.xlu0 %v365, 32
        %v823 = vpop.permute.xlu0 %822
        %824 = vrot.lane.b32.xlu0 %v367, 32
        %v825 = vpop.permute.xlu0 %824
        %826 = vrot.lane.b32.xlu0 %v370, 32
        %v827 = vpop.permute.xlu0 %826
        %828 = vrot.lane.b32.xlu0 %v372, 32
        %v829 = vpop.permute.xlu0 %828
        %830 = vrot.lane.b32.xlu0 %v375, 32
        %v831 = vpop.permute.xlu0 %830
        %832 = vrot.lane.b32.xlu0 %v377, 32
        %v833 = vpop.permute.xlu0 %832
        %834 = vrot.lane.b32.xlu0 %v380, 32
        %v835 = vpop.permute.xlu0 %834
        %836 = vrot.lane.b32.xlu0 %v382, 32
        %v837 = vpop.permute.xlu0 %836
        %838 = vrot.lane.b32.xlu0 %v469, 32
        %v839 = vpop.permute.xlu0 %838
        %840 = vrot.lane.b32.xlu0 %v471, 32
        %v841 = vpop.permute.xlu0 %840
        %874 = vrot.lane.b32.xlu0 %v391, 40
        %v875 = vpop.permute.xlu0 %874
        %876 = vrot.lane.b32.xlu0 %v393, 40
        %v877 = vpop.permute.xlu0 %876
        %878 = vrot.lane.b32.xlu0 %v396, 40
        %v879 = vpop.permute.xlu0 %878
        %880 = vrot.lane.b32.xlu0 %v398, 40
        %v881 = vpop.permute.xlu0 %880
        %882 = vrot.lane.b32.xlu0 %v401, 40
        %v883 = vpop.permute.xlu0 %882
        %884 = vrot.lane.b32.xlu0 %v403, 40
        %v885 = vpop.permute.xlu0 %884
        %886 = vrot.lane.b32.xlu0 %v406, 40
        %v887 = vpop.permute.xlu0 %886
        %888 = vrot.lane.b32.xlu0 %v408, 40
        %v889 = vpop.permute.xlu0 %888
        %890 = vrot.lane.b32.xlu0 %v411, 40
        %v891 = vpop.permute.xlu0 %890
        %892 = vrot.lane.b32.xlu0 %v413, 40
        %v893 = vpop.permute.xlu0 %892
        %894 = vrot.lane.b32.xlu0 %v416, 40
        %v895 = vpop.permute.xlu0 %894
        %896 = vrot.lane.b32.xlu0 %v418, 40
        %v897 = vpop.permute.xlu0 %896
        %898 = vrot.lane.b32.xlu0 %v421, 40
        %v899 = vpop.permute.xlu0 %898
        %900 = vrot.lane.b32.xlu0 %v423, 40
        %v901 = vpop.permute.xlu0 %900
        %902 = vrot.lane.b32.xlu0 %v426, 40
        %v903 = vpop.permute.xlu0 %902
        %904 = vrot.lane.b32.xlu0 %v428, 40
        %v905 = vpop.permute.xlu0 %904
        %906 = vrot.lane.b32.xlu0 %v431, 40
        %v907 = vpop.permute.xlu0 %906
        %908 = vrot.lane.b32.xlu0 %v433, 40
        %v909 = vpop.permute.xlu0 %908
        %910 = vrot.lane.b32.xlu0 %v436, 40
        %v911 = vpop.permute.xlu0 %910
        %912 = vrot.lane.b32.xlu0 %v438, 40
        %v913 = vpop.permute.xlu0 %912
        %914 = vrot.lane.b32.xlu0 %v441, 40
        %v915 = vpop.permute.xlu0 %914
        %916 = vrot.lane.b32.xlu0 %v443, 40
        %v917 = vpop.permute.xlu0 %916
        %918 = vrot.lane.b32.xlu0 %v446, 40
        %v919 = vpop.permute.xlu0 %918
        %920 = vrot.lane.b32.xlu0 %v448, 40
        %v921 = vpop.permute.xlu0 %920
        %922 = vrot.lane.b32.xlu0 %v451, 40
        %v923 = vpop.permute.xlu0 %922
        %924 = vrot.lane.b32.xlu0 %v453, 40
        %v925 = vpop.permute.xlu0 %924
        %926 = vrot.lane.b32.xlu0 %v456, 40
        %v927 = vpop.permute.xlu0 %926
        %928 = vrot.lane.b32.xlu0 %v458, 40
        %v929 = vpop.permute.xlu0 %928
        %930 = vrot.lane.b32.xlu0 %v461, 40
        %v931 = vpop.permute.xlu0 %930
        %932 = vrot.lane.b32.xlu0 %v463, 40
        %v933 = vpop.permute.xlu0 %932
        %934 = vrot.lane.b32.xlu0 %v474, 40
        %v935 = vpop.permute.xlu0 %934
        %936 = vrot.lane.b32.xlu0 %v476, 40
        %v937 = vpop.permute.xlu0 %936
        %970 = vrot.lane.b32.xlu0 %v206, 48
        %v971 = vpop.permute.xlu0 %970
        %972 = vrot.lane.b32.xlu0 %v207, 48
        %v973 = vpop.permute.xlu0 %972
        %974 = vrot.lane.b32.xlu0 %v209, 48
        %v975 = vpop.permute.xlu0 %974
        %976 = vrot.lane.b32.xlu0 %v210, 48
        %v977 = vpop.permute.xlu0 %976
        %978 = vrot.lane.b32.xlu0 %v212, 48
        %v979 = vpop.permute.xlu0 %978
        %980 = vrot.lane.b32.xlu0 %v213, 48
        %v981 = vpop.permute.xlu0 %980
        %982 = vrot.lane.b32.xlu0 %v215, 48
        %v983 = vpop.permute.xlu0 %982
        %984 = vrot.lane.b32.xlu0 %v216, 48
        %v985 = vpop.permute.xlu0 %984
        %986 = vrot.lane.b32.xlu0 %v218, 48
        %v987 = vpop.permute.xlu0 %986
        %988 = vrot.lane.b32.xlu0 %v219, 48
        %v989 = vpop.permute.xlu0 %988
        %990 = vrot.lane.b32.xlu0 %v221, 48
        %v991 = vpop.permute.xlu0 %990
        %992 = vrot.lane.b32.xlu0 %v222, 48
        %v993 = vpop.permute.xlu0 %992
        %994 = vrot.lane.b32.xlu0 %v224, 48
        %v995 = vpop.permute.xlu0 %994
        %996 = vrot.lane.b32.xlu0 %v225, 48
        %v997 = vpop.permute.xlu0 %996
        %998 = vrot.lane.b32.xlu0 %v227, 48
        %v999 = vpop.permute.xlu0 %998
        %1000 = vrot.lane.b32.xlu0 %v228, 48
        %v1001 = vpop.permute.xlu0 %1000
        %1002 = vrot.lane.b32.xlu0 %v230, 48
        %v1003 = vpop.permute.xlu0 %1002
        %1004 = vrot.lane.b32.xlu0 %v231, 48
        %v1005 = vpop.permute.xlu0 %1004
        %1006 = vrot.lane.b32.xlu0 %v233, 48
        %v1007 = vpop.permute.xlu0 %1006
        %1008 = vrot.lane.b32.xlu0 %v234, 48
        %v1009 = vpop.permute.xlu0 %1008
        %1010 = vrot.lane.b32.xlu0 %v236, 48
        %v1011 = vpop.permute.xlu0 %1010
        %1012 = vrot.lane.b32.xlu0 %v237, 48
        %v1013 = vpop.permute.xlu0 %1012
        %1014 = vrot.lane.b32.xlu0 %v239, 48
        %v1015 = vpop.permute.xlu0 %1014
        %1016 = vrot.lane.b32.xlu0 %v240, 48
        %v1017 = vpop.permute.xlu0 %1016
        %1018 = vrot.lane.b32.xlu0 %v242, 48
        %v1019 = vpop.permute.xlu0 %1018
        %1020 = vrot.lane.b32.xlu0 %v243, 48
        %v1021 = vpop.permute.xlu0 %1020
        %1022 = vrot.lane.b32.xlu0 %v245, 48
        %v1023 = vpop.permute.xlu0 %1022
        %1024 = vrot.lane.b32.xlu0 %v246, 48
        %v1025 = vpop.permute.xlu0 %1024
        %1026 = vrot.lane.b32.xlu0 %v248, 48
        %v1027 = vpop.permute.xlu0 %1026
        %1028 = vrot.lane.b32.xlu0 %v249, 48
        %v1029 = vpop.permute.xlu0 %1028
        %1030 = vrot.lane.b32.xlu0 %v251, 48
        %v1031 = vpop.permute.xlu0 %1030
        %1032 = vrot.lane.b32.xlu0 %v252, 48
        %v1033 = vpop.permute.xlu0 %1032
        %1066 = vrot.lane.b32.xlu0 %v315, 56
        %v1067 = vpop.permute.xlu0 %1066
        %1068 = vrot.lane.b32.xlu0 %v317, 56
        %v1069 = vpop.permute.xlu0 %1068
        %1070 = vrot.lane.b32.xlu0 %v320, 56
        %v1071 = vpop.permute.xlu0 %1070
        %1072 = vrot.lane.b32.xlu0 %v322, 56
        %v1073 = vpop.permute.xlu0 %1072
        %1074 = vrot.lane.b32.xlu0 %v325, 56
        %v1075 = vpop.permute.xlu0 %1074
        %1076 = vrot.lane.b32.xlu0 %v327, 56
        %v1077 = vpop.permute.xlu0 %1076
        %1078 = vrot.lane.b32.xlu0 %v330, 56
        %v1079 = vpop.permute.xlu0 %1078
        %1080 = vrot.lane.b32.xlu0 %v332, 56
        %v1081 = vpop.permute.xlu0 %1080
        %1082 = vrot.lane.b32.xlu0 %v335, 56
        %v1083 = vpop.permute.xlu0 %1082
        %1084 = vrot.lane.b32.xlu0 %v337, 56
        %v1085 = vpop.permute.xlu0 %1084
        %1086 = vrot.lane.b32.xlu0 %v340, 56
        %v1087 = vpop.permute.xlu0 %1086
        %1088 = vrot.lane.b32.xlu0 %v342, 56
        %v1089 = vpop.permute.xlu0 %1088
        %1090 = vrot.lane.b32.xlu0 %v345, 56
        %v1091 = vpop.permute.xlu0 %1090
        %1092 = vrot.lane.b32.xlu0 %v347, 56
        %v1093 = vpop.permute.xlu0 %1092
        %1094 = vrot.lane.b32.xlu0 %v350, 56
        %v1095 = vpop.permute.xlu0 %1094
        %1096 = vrot.lane.b32.xlu0 %v352, 56
        %v1097 = vpop.permute.xlu0 %1096
        %1098 = vrot.lane.b32.xlu0 %v355, 56
        %v1099 = vpop.permute.xlu0 %1098
        %1100 = vrot.lane.b32.xlu0 %v357, 56
        %v1101 = vpop.permute.xlu0 %1100
        %1102 = vrot.lane.b32.xlu0 %v360, 56
        %v1103 = vpop.permute.xlu0 %1102
        %1104 = vrot.lane.b32.xlu0 %v362, 56
        %v1105 = vpop.permute.xlu0 %1104
        %1106 = vrot.lane.b32.xlu0 %v365, 56
        %v1107 = vpop.permute.xlu0 %1106
        %1108 = vrot.lane.b32.xlu0 %v367, 56
        %v1109 = vpop.permute.xlu0 %1108
        %1110 = vrot.lane.b32.xlu0 %v370, 56
        %v1111 = vpop.permute.xlu0 %1110
        %1112 = vrot.lane.b32.xlu0 %v372, 56
        %v1113 = vpop.permute.xlu0 %1112
        %1114 = vrot.lane.b32.xlu0 %v375, 56
        %v1115 = vpop.permute.xlu0 %1114
        %1116 = vrot.lane.b32.xlu0 %v377, 56
        %v1117 = vpop.permute.xlu0 %1116
        %1118 = vrot.lane.b32.xlu0 %v380, 56
        %v1119 = vpop.permute.xlu0 %1118
        %1120 = vrot.lane.b32.xlu0 %v382, 56
        %v1121 = vpop.permute.xlu0 %1120
        %1122 = vrot.lane.b32.xlu0 %v469, 56
        %v1123 = vpop.permute.xlu0 %1122
        %1124 = vrot.lane.b32.xlu0 %v471, 56
        %v1125 = vpop.permute.xlu0 %1124
        %1126 = vrot.lane.b32.xlu0 %v482, 56
        %v1127 = vpop.permute.xlu0 %1126
        %1128 = vrot.lane.b32.xlu0 %v484, 56
        %v1129 = vpop.permute.xlu0 %1128
        %1162 = vrot.lane.b32.xlu0 %v396, 64
        %v1163 = vpop.permute.xlu0 %1162
        %1164 = vrot.lane.b32.xlu0 %v398, 64
        %v1165 = vpop.permute.xlu0 %1164
        %1166 = vrot.lane.b32.xlu0 %v401, 64
        %v1167 = vpop.permute.xlu0 %1166
        %1168 = vrot.lane.b32.xlu0 %v403, 64
        %v1169 = vpop.permute.xlu0 %1168
        %1170 = vrot.lane.b32.xlu0 %v406, 64
        %v1171 = vpop.permute.xlu0 %1170
        %1172 = vrot.lane.b32.xlu0 %v408, 64
        %v1173 = vpop.permute.xlu0 %1172
        %1174 = vrot.lane.b32.xlu0 %v411, 64
        %v1175 = vpop.permute.xlu0 %1174
        %1176 = vrot.lane.b32.xlu0 %v413, 64
        %v1177 = vpop.permute.xlu0 %1176
        %1178 = vrot.lane.b32.xlu0 %v416, 64
        %v1179 = vpop.permute.xlu0 %1178
        %1180 = vrot.lane.b32.xlu0 %v418, 64
        %v1181 = vpop.permute.xlu0 %1180
        %1182 = vrot.lane.b32.xlu0 %v421, 64
        %v1183 = vpop.permute.xlu0 %1182
        %1184 = vrot.lane.b32.xlu0 %v423, 64
        %v1185 = vpop.permute.xlu0 %1184
        %1186 = vrot.lane.b32.xlu0 %v426, 64
        %v1187 = vpop.permute.xlu0 %1186
        %1188 = vrot.lane.b32.xlu0 %v428, 64
        %v1189 = vpop.permute.xlu0 %1188
        %1190 = vrot.lane.b32.xlu0 %v431, 64
        %v1191 = vpop.permute.xlu0 %1190
        %1192 = vrot.lane.b32.xlu0 %v433, 64
        %v1193 = vpop.permute.xlu0 %1192
        %1194 = vrot.lane.b32.xlu0 %v436, 64
        %v1195 = vpop.permute.xlu0 %1194
        %1196 = vrot.lane.b32.xlu0 %v438, 64
        %v1197 = vpop.permute.xlu0 %1196
        %1198 = vrot.lane.b32.xlu0 %v441, 64
        %v1199 = vpop.permute.xlu0 %1198
        %1200 = vrot.lane.b32.xlu0 %v443, 64
        %v1201 = vpop.permute.xlu0 %1200
        %1202 = vrot.lane.b32.xlu0 %v446, 64
        %v1203 = vpop.permute.xlu0 %1202
        %1204 = vrot.lane.b32.xlu0 %v448, 64
        %v1205 = vpop.permute.xlu0 %1204
        %1206 = vrot.lane.b32.xlu0 %v451, 64
        %v1207 = vpop.permute.xlu0 %1206
        %1208 = vrot.lane.b32.xlu0 %v453, 64
        %v1209 = vpop.permute.xlu0 %1208
        %1210 = vrot.lane.b32.xlu0 %v456, 64
        %v1211 = vpop.permute.xlu0 %1210
        %1212 = vrot.lane.b32.xlu0 %v458, 64
        %v1213 = vpop.permute.xlu0 %1212
        %1214 = vrot.lane.b32.xlu0 %v461, 64
        %v1215 = vpop.permute.xlu0 %1214
        %1216 = vrot.lane.b32.xlu0 %v463, 64
        %v1217 = vpop.permute.xlu0 %1216
        %1218 = vrot.lane.b32.xlu0 %v474, 64
        %v1219 = vpop.permute.xlu0 %1218
        %1220 = vrot.lane.b32.xlu0 %v476, 64
        %v1221 = vpop.permute.xlu0 %1220
        %1222 = vrot.lane.b32.xlu0 %v487, 64
        %v1223 = vpop.permute.xlu0 %1222
        %1224 = vrot.lane.b32.xlu0 %v489, 64
        %v1225 = vpop.permute.xlu0 %1224
        %vm1258 = vcmask 64512
        %v1259 = vsel %vm1258, %v200, %v491
        %v1260 = vsel %vm1258, %v201, %v493
        %v1261 = vsel %vm1258, %v203, %v495
        %v1262 = vsel %vm1258, %v204, %v497
        %v1263 = vsel %vm1258, %v206, %v499
        %v1264 = vsel %vm1258, %v207, %v501
        %v1265 = vsel %vm1258, %v209, %v503
        %v1266 = vsel %vm1258, %v210, %v505
        %v1267 = vsel %vm1258, %v212, %v507
        %v1268 = vsel %vm1258, %v213, %v509
        %v1269 = vsel %vm1258, %v215, %v511
        %v1270 = vsel %vm1258, %v216, %v513
        %v1271 = vsel %vm1258, %v218, %v515
        %v1272 = vsel %vm1258, %v219, %v517
        %v1273 = vsel %vm1258, %v221, %v519
        %v1274 = vsel %vm1258, %v222, %v521
        %v1275 = vsel %vm1258, %v224, %v523
        %v1276 = vsel %vm1258, %v225, %v525
        %v1277 = vsel %vm1258, %v227, %v527
        %v1278 = vsel %vm1258, %v228, %v529
        %v1279 = vsel %vm1258, %v230, %v531
        %v1280 = vsel %vm1258, %v231, %v533
        %v1281 = vsel %vm1258, %v233, %v535
        %v1282 = vsel %vm1258, %v234, %v537
        %v1283 = vsel %vm1258, %v236, %v539
        %v1284 = vsel %vm1258, %v237, %v541
        %v1285 = vsel %vm1258, %v239, %v543
        %v1286 = vsel %vm1258, %v240, %v545
        %v1287 = vsel %vm1258, %v242, %v547
        %v1288 = vsel %vm1258, %v243, %v549
        %v1289 = vsel %vm1258, %v245, %v551
        %v1290 = vsel %vm1258, %v246, %v553
        %vm1291 = vcmask 130048
        %v1292 = vsel %vm1291, %v1259, %v587
        %v1293 = vsel %vm1291, %v1260, %v589
        %v1294 = vsel %vm1291, %v1261, %v591
        %v1295 = vsel %vm1291, %v1262, %v593
        %v1296 = vsel %vm1291, %v1263, %v595
        %v1297 = vsel %vm1291, %v1264, %v597
        %v1298 = vsel %vm1291, %v1265, %v599
        %v1299 = vsel %vm1291, %v1266, %v601
        %v1300 = vsel %vm1291, %v1267, %v603
        %v1301 = vsel %vm1291, %v1268, %v605
        %v1302 = vsel %vm1291, %v1269, %v607
        %v1303 = vsel %vm1291, %v1270, %v609
        %v1304 = vsel %vm1291, %v1271, %v611
        %v1305 = vsel %vm1291, %v1272, %v613
        %v1306 = vsel %vm1291, %v1273, %v615
        %v1307 = vsel %vm1291, %v1274, %v617
        %v1308 = vsel %vm1291, %v1275, %v619
        %v1309 = vsel %vm1291, %v1276, %v621
        %v1310 = vsel %vm1291, %v1277, %v623
        %v1311 = vsel %vm1291, %v1278, %v625
        %v1312 = vsel %vm1291, %v1279, %v627
        %v1313 = vsel %vm1291, %v1280, %v629
        %v1314 = vsel %vm1291, %v1281, %v631
        %v1315 = vsel %vm1291, %v1282, %v633
        %v1316 = vsel %vm1291, %v1283, %v635
        %v1317 = vsel %vm1291, %v1284, %v637
        %v1318 = vsel %vm1291, %v1285, %v639
        %v1319 = vsel %vm1291, %v1286, %v641
        %v1320 = vsel %vm1291, %v1287, %v643
        %v1321 = vsel %vm1291, %v1288, %v645
        %v1322 = vsel %vm1291, %v1289, %v647
        %v1323 = vsel %vm1291, %v1290, %v649
        %vm1324 = vcmask 195584
        %v1325 = vsel %vm1324, %v1292, %v683
        %v1326 = vsel %vm1324, %v1293, %v685
        %v1327 = vsel %vm1324, %v1294, %v687
        %v1328 = vsel %vm1324, %v1295, %v689
        %v1329 = vsel %vm1324, %v1296, %v691
        %v1330 = vsel %vm1324, %v1297, %v693
        %v1331 = vsel %vm1324, %v1298, %v695
        %v1332 = vsel %vm1324, %v1299, %v697
        %v1333 = vsel %vm1324, %v1300, %v699
        %v1334 = vsel %vm1324, %v1301, %v701
        %v1335 = vsel %vm1324, %v1302, %v703
        %v1336 = vsel %vm1324, %v1303, %v705
        %v1337 = vsel %vm1324, %v1304, %v707
        %v1338 = vsel %vm1324, %v1305, %v709
        %v1339 = vsel %vm1324, %v1306, %v711
        %v1340 = vsel %vm1324, %v1307, %v713
        %v1341 = vsel %vm1324, %v1308, %v715
        %v1342 = vsel %vm1324, %v1309, %v717
        %v1343 = vsel %vm1324, %v1310, %v719
        %v1344 = vsel %vm1324, %v1311, %v721
        %v1345 = vsel %vm1324, %v1312, %v723
        %v1346 = vsel %vm1324, %v1313, %v725
        %v1347 = vsel %vm1324, %v1314, %v727
        %v1348 = vsel %vm1324, %v1315, %v729
        %v1349 = vsel %vm1324, %v1316, %v731
        %v1350 = vsel %vm1324, %v1317, %v733
        %v1351 = vsel %vm1324, %v1318, %v735
        %v1352 = vsel %vm1324, %v1319, %v737
        %v1353 = vsel %vm1324, %v1320, %v739
        %v1354 = vsel %vm1324, %v1321, %v741
        %v1355 = vsel %vm1324, %v1322, %v743
        %v1356 = vsel %vm1324, %v1323, %v745
        %vm1357 = vcmask 261120
        %v1358 = vsel %vm1357, %v1325, %v779
        %v1359 = vsel %vm1357, %v1326, %v781
        %v1360 = vsel %vm1357, %v1327, %v783
        %v1361 = vsel %vm1357, %v1328, %v785
        %v1362 = vsel %vm1357, %v1329, %v787
        %v1363 = vsel %vm1357, %v1330, %v789
        %v1364 = vsel %vm1357, %v1331, %v791
        %v1365 = vsel %vm1357, %v1332, %v793
        %v1366 = vsel %vm1357, %v1333, %v795
        %v1367 = vsel %vm1357, %v1334, %v797
        %v1368 = vsel %vm1357, %v1335, %v799
        %v1369 = vsel %vm1357, %v1336, %v801
        %v1370 = vsel %vm1357, %v1337, %v803
        %v1371 = vsel %vm1357, %v1338, %v805
        %v1372 = vsel %vm1357, %v1339, %v807
        %v1373 = vsel %vm1357, %v1340, %v809
        %v1374 = vsel %vm1357, %v1341, %v811
        %v1375 = vsel %vm1357, %v1342, %v813
        %v1376 = vsel %vm1357, %v1343, %v815
        %v1377 = vsel %vm1357, %v1344, %v817
        %v1378 = vsel %vm1357, %v1345, %v819
        %v1379 = vsel %vm1357, %v1346, %v821
        %v1380 = vsel %vm1357, %v1347, %v823
        %v1381 = vsel %vm1357, %v1348, %v825
        %v1382 = vsel %vm1357, %v1349, %v827
        %v1383 = vsel %vm1357, %v1350, %v829
        %v1384 = vsel %vm1357, %v1351, %v831
        %v1385 = vsel %vm1357, %v1352, %v833
        %v1386 = vsel %vm1357, %v1353, %v835
        %v1387 = vsel %vm1357, %v1354, %v837
        %v1388 = vsel %vm1357, %v1355, %v839
        %v1389 = vsel %vm1357, %v1356, %v841
        %vm1390 = vcmask 326656
        %v1391 = vsel %vm1390, %v1358, %v875
        %v1392 = vsel %vm1390, %v1359, %v877
        %v1393 = vsel %vm1390, %v1360, %v879
        %v1394 = vsel %vm1390, %v1361, %v881
        %v1395 = vsel %vm1390, %v1362, %v883
        %v1396 = vsel %vm1390, %v1363, %v885
        %v1397 = vsel %vm1390, %v1364, %v887
        %v1398 = vsel %vm1390, %v1365, %v889
        %v1399 = vsel %vm1390, %v1366, %v891
        %v1400 = vsel %vm1390, %v1367, %v893
        %v1401 = vsel %vm1390, %v1368, %v895
        %v1402 = vsel %vm1390, %v1369, %v897
        %v1403 = vsel %vm1390, %v1370, %v899
        %v1404 = vsel %vm1390, %v1371, %v901
        %v1405 = vsel %vm1390, %v1372, %v903
        %v1406 = vsel %vm1390, %v1373, %v905
        %v1407 = vsel %vm1390, %v1374, %v907
        %v1408 = vsel %vm1390, %v1375, %v909
        %v1409 = vsel %vm1390, %v1376, %v911
        %v1410 = vsel %vm1390, %v1377, %v913
        %v1411 = vsel %vm1390, %v1378, %v915
        %v1412 = vsel %vm1390, %v1379, %v917
        %v1413 = vsel %vm1390, %v1380, %v919
        %v1414 = vsel %vm1390, %v1381, %v921
        %v1415 = vsel %vm1390, %v1382, %v923
        %v1416 = vsel %vm1390, %v1383, %v925
        %v1417 = vsel %vm1390, %v1384, %v927
        %v1418 = vsel %vm1390, %v1385, %v929
        %v1419 = vsel %vm1390, %v1386, %v931
        %v1420 = vsel %vm1390, %v1387, %v933
        %v1421 = vsel %vm1390, %v1388, %v935
        %v1422 = vsel %vm1390, %v1389, %v937
        %vm1423 = vcmask 392192
        %v1424 = vsel %vm1423, %v1391, %v971
        %v1425 = vsel %vm1423, %v1392, %v973
        %v1426 = vsel %vm1423, %v1393, %v975
        %v1427 = vsel %vm1423, %v1394, %v977
        %v1428 = vsel %vm1423, %v1395, %v979
        %v1429 = vsel %vm1423, %v1396, %v981
        %v1430 = vsel %vm1423, %v1397, %v983
        %v1431 = vsel %vm1423, %v1398, %v985
        %v1432 = vsel %vm1423, %v1399, %v987
        %v1433 = vsel %vm1423, %v1400, %v989
        %v1434 = vsel %vm1423, %v1401, %v991
        %v1435 = vsel %vm1423, %v1402, %v993
        %v1436 = vsel %vm1423, %v1403, %v995
        %v1437 = vsel %vm1423, %v1404, %v997
        %v1438 = vsel %vm1423, %v1405, %v999
        %v1439 = vsel %vm1423, %v1406, %v1001
        %v1440 = vsel %vm1423, %v1407, %v1003
        %v1441 = vsel %vm1423, %v1408, %v1005
        %v1442 = vsel %vm1423, %v1409, %v1007
        %v1443 = vsel %vm1423, %v1410, %v1009
        %v1444 = vsel %vm1423, %v1411, %v1011
        %v1445 = vsel %vm1423, %v1412, %v1013
        %v1446 = vsel %vm1423, %v1413, %v1015
        %v1447 = vsel %vm1423, %v1414, %v1017
        %v1448 = vsel %vm1423, %v1415, %v1019
        %v1449 = vsel %vm1423, %v1416, %v1021
        %v1450 = vsel %vm1423, %v1417, %v1023
        %v1451 = vsel %vm1423, %v1418, %v1025
        %v1452 = vsel %vm1423, %v1419, %v1027
        %v1453 = vsel %vm1423, %v1420, %v1029
        %v1454 = vsel %vm1423, %v1421, %v1031
        %v1455 = vsel %vm1423, %v1422, %v1033
        %vm1456 = vcmask 457728
        %v1457 = vsel %vm1456, %v1424, %v1067
        %v1458 = vsel %vm1456, %v1425, %v1069
        %v1459 = vsel %vm1456, %v1426, %v1071
        %v1460 = vsel %vm1456, %v1427, %v1073
        %v1461 = vsel %vm1456, %v1428, %v1075
        %v1462 = vsel %vm1456, %v1429, %v1077
        %v1463 = vsel %vm1456, %v1430, %v1079
        %v1464 = vsel %vm1456, %v1431, %v1081
        %v1465 = vsel %vm1456, %v1432, %v1083
        %v1466 = vsel %vm1456, %v1433, %v1085
        %v1467 = vsel %vm1456, %v1434, %v1087
        %v1468 = vsel %vm1456, %v1435, %v1089
        %v1469 = vsel %vm1456, %v1436, %v1091
        %v1470 = vsel %vm1456, %v1437, %v1093
        %v1471 = vsel %vm1456, %v1438, %v1095
        %v1472 = vsel %vm1456, %v1439, %v1097
        %v1473 = vsel %vm1456, %v1440, %v1099
        %v1474 = vsel %vm1456, %v1441, %v1101
        %v1475 = vsel %vm1456, %v1442, %v1103
        %v1476 = vsel %vm1456, %v1443, %v1105
        %v1477 = vsel %vm1456, %v1444, %v1107
        %v1478 = vsel %vm1456, %v1445, %v1109
        %v1479 = vsel %vm1456, %v1446, %v1111
        %v1480 = vsel %vm1456, %v1447, %v1113
        %v1481 = vsel %vm1456, %v1448, %v1115
        %v1482 = vsel %vm1456, %v1449, %v1117
        %v1483 = vsel %vm1456, %v1450, %v1119
        %v1484 = vsel %vm1456, %v1451, %v1121
        %v1485 = vsel %vm1456, %v1452, %v1123
        %v1486 = vsel %vm1456, %v1453, %v1125
        %v1487 = vsel %vm1456, %v1454, %v1127
        %v1488 = vsel %vm1456, %v1455, %v1129
        %vm1489 = vcmask 523264
        %v1490 = vsel %vm1489, %v1457, %v1163
        %v1491 = vsel %vm1489, %v1458, %v1165
        %v1492 = vsel %vm1489, %v1459, %v1167
        %v1493 = vsel %vm1489, %v1460, %v1169
        %v1494 = vsel %vm1489, %v1461, %v1171
        %v1495 = vsel %vm1489, %v1462, %v1173
        %v1496 = vsel %vm1489, %v1463, %v1175
        %v1497 = vsel %vm1489, %v1464, %v1177
        %v1498 = vsel %vm1489, %v1465, %v1179
        %v1499 = vsel %vm1489, %v1466, %v1181
        %v1500 = vsel %vm1489, %v1467, %v1183
        %v1501 = vsel %vm1489, %v1468, %v1185
        %v1502 = vsel %vm1489, %v1469, %v1187
        %v1503 = vsel %vm1489, %v1470, %v1189
        %v1504 = vsel %vm1489, %v1471, %v1191
        %v1505 = vsel %vm1489, %v1472, %v1193
        %v1506 = vsel %vm1489, %v1473, %v1195
        %v1507 = vsel %vm1489, %v1474, %v1197
        %v1508 = vsel %vm1489, %v1475, %v1199
        %v1509 = vsel %vm1489, %v1476, %v1201
        %v1510 = vsel %vm1489, %v1477, %v1203
        %v1511 = vsel %vm1489, %v1478, %v1205
        %v1512 = vsel %vm1489, %v1479, %v1207
        %v1513 = vsel %vm1489, %v1480, %v1209
        %v1514 = vsel %vm1489, %v1481, %v1211
        %v1515 = vsel %vm1489, %v1482, %v1213
        %v1516 = vsel %vm1489, %v1483, %v1215
        %v1517 = vsel %vm1489, %v1484, %v1217
        %v1518 = vsel %vm1489, %v1485, %v1219
        %v1519 = vsel %vm1489, %v1486, %v1221
        %v1520 = vsel %vm1489, %v1487, %v1223
        %v1521 = vsel %vm1489, %v1488, %v1225
        %v1522 = vld [vmem:[%s1] sm:$0xff]
        %v1523 = vld [vmem:[%s1 + $0x8] sm:$0xff]
        %v1524 = vld [vmem:[%s1 + $0x10] sm:$0xff]
        %v1525 = vld [vmem:[%s1 + $0x18] sm:$0xff]
        %v1526 = vld [vmem:[%s1 + $0x20] sm:$0xff]
        %v1527 = vld [vmem:[%s1 + $0x28] sm:$0xff]
        %v1528 = vld [vmem:[%s1 + $0x30] sm:$0xff]
        %v1529 = vld [vmem:[%s1 + $0x38] sm:$0xff]
        %v1530 = vld [vmem:[%s1 + $0x40] sm:$0xff]
        %vm1531 = vcmask 588800
        %v1533 = vsel %vm1531, %v1490, 0
        %v1536 = vsel %vm1531, %v1491, 0
        %v1539 = vsel %vm1531, %v1492, 0
        %v1542 = vsel %vm1531, %v1493, 0
        %v1545 = vsel %vm1531, %v1494, 0
        %v1548 = vsel %vm1531, %v1495, 0
        %v1551 = vsel %vm1531, %v1496, 0
        %v1554 = vsel %vm1531, %v1497, 0
        %v1557 = vsel %vm1531, %v1498, 0
        %v1560 = vsel %vm1531, %v1499, 0
        %v1563 = vsel %vm1531, %v1500, 0
        %v1566 = vsel %vm1531, %v1501, 0
        %v1569 = vsel %vm1531, %v1502, 0
        %v1572 = vsel %vm1531, %v1503, 0
        %v1575 = vsel %vm1531, %v1504, 0
        %v1578 = vsel %vm1531, %v1505, 0
        %v1581 = vsel %vm1531, %v1506, 0
        %v1584 = vsel %vm1531, %v1507, 0
        %v1587 = vsel %vm1531, %v1508, 0
        %v1590 = vsel %vm1531, %v1509, 0
        %v1593 = vsel %vm1531, %v1510, 0
        %v1596 = vsel %vm1531, %v1511, 0
        %v1599 = vsel %vm1531, %v1512, 0
        %v1602 = vsel %vm1531, %v1513, 0
        %v1605 = vsel %vm1531, %v1514, 0
        %v1608 = vsel %vm1531, %v1515, 0
        %v1611 = vsel %vm1531, %v1516, 0
        %v1614 = vsel %vm1531, %v1517, 0
        %v1617 = vsel %vm1531, %v1518, 0
        %v1620 = vsel %vm1531, %v1519, 0
        %v1623 = vsel %vm1531, %v1520, 0
        %v1626 = vsel %vm1531, %v1521, 0
        %1628 = vmatprep.subr.mxu0 0.0
        %1629 = vmatpush1.msra.mxu0 %v1522
        %1630 = vmatprep.subr.mxu0 0.0
        %1631 = vmatpush1.msra.mxu0 %v1523
        %1632 = vmatprep.subr.mxu0 0.0
        %1633 = vmatpush1.msra.mxu0 %v1524
        %1634 = vmatprep.subr.mxu0 0.0
        %1635 = vmatpush1.msra.mxu0 %v1525
        %1636 = vmatprep.subr.mxu0 0.0
        %1637 = vmatpush1.msra.mxu0 %v1526
        %1638 = vmatprep.subr.mxu0 0.0
        %1639 = vmatpush1.msra.mxu0 %v1527
        %1640 = vmatprep.subr.mxu0 0.0
        %1641 = vmatpush1.msra.mxu0 %v1528
        %1642 = vmatprep.subr.mxu0 0.0
        %1643 = vmatpush1.msra.mxu0 %v1529
        %1644 = vmatprep.subr.mxu0 0.0
        %1645 = vmatpush1.msra.mxu0 %v1530
        %1646 = vmatprep.subr.mxu0 0.0
        %1647 = vmatpush1.msra.mxu0 0.0
        %1648 = vmatprep.subr.mxu0 0.0
        %1649 = vmatpush1.msra.mxu0 0.0
        %1650 = vmatprep.subr.mxu0 0.0
        %1651 = vmatpush1.msra.mxu0 0.0
        %1652 = vmatprep.subr.mxu0 0.0
        %1653 = vmatpush1.msra.mxu0 0.0
        %1654 = vmatprep.subr.mxu0 0.0
        %1655 = vmatpush1.msra.mxu0 0.0
        %1656 = vmatprep.subr.mxu0 0.0
        %1657 = vmatpush1.msra.mxu0 0.0
        %1658 = vmatprep.subr.mxu0 0.0
        %1659 = vmatpush1.msra.mxu0 0.0
        %1660 = vmatprep.subr.mxu0 0.0
        %1661 = vmatpush1.msra.mxu0 0.0
        %1662 = vmatprep.subr.mxu0 0.0
        %1663 = vmatpush1.msra.mxu0 0.0
        %1664 = vmatprep.subr.mxu0 0.0
        %1665 = vmatpush1.msra.mxu0 0.0
        %1666 = vmatprep.subr.mxu0 0.0
        %1667 = vmatpush1.msra.mxu0 0.0
        %1668 = vmatprep.subr.mxu0 0.0
        %1669 = vmatpush1.msra.mxu0 0.0
        %1670 = vmatprep.subr.mxu0 0.0
        %1671 = vmatpush1.msra.mxu0 0.0
        %1672 = vmatprep.subr.mxu0 0.0
        %1673 = vmatpush1.msra.mxu0 0.0
        %1674 = vmatprep.subr.mxu0 0.0
        %1675 = vmatpush1.msra.mxu0 0.0
        %1676 = vmatprep.subr.mxu0 0.0
        %1677 = vmatpush1.msra.mxu0 0.0
        %1678 = vmatprep.subr.mxu0 0.0
        %1679 = vmatpush1.msra.mxu0 0.0
        %1680 = vmatprep.subr.mxu0 0.0
        %1681 = vmatpush1.msra.mxu0 0.0
        %1682 = vmatprep.subr.mxu0 0.0
        %1683 = vmatpush1.msra.mxu0 0.0
        %1684 = vmatprep.subr.mxu0 0.0
        %1685 = vmatpush1.msra.mxu0 0.0
        %1686 = vmatprep.subr.mxu0 0.0
        %1687 = vmatpush1.msra.mxu0 0.0
        %1688 = vmatprep.subr.mxu0 0.0
        %1689 = vmatpush1.msra.mxu0 0.0
        %1690 = vmatprep.subr.mxu0 0.0
        %1691 = vmatpush1.msra.mxu0 0.0
        %1692 = vmatprep.mubr.f32.mxu0 0.0
        %1693 = vmatmul.mubr.f32.gmra.mrb[0].mxu0 %v1533
        %v1694 = vpop.f32.mrb[0].mxu0
        %v1695 = vadd.f32 0.0, %v1694
        %v1696 = vpop.f32.mrb[0].mxu0
        %1697 = vmatprep.mubr.f32.mxu0 0.0
        %1698 = vmatmul.mubr.f32.gmra.mrb[0].mxu0 %v1536
        %v1699 = vpop.f32.mrb[0].mxu0
        %v1700 = vadd.f32 0.0, %v1699
        %v1701 = vpop.f32.mrb[0].mxu0
        %1702 = vmatprep.mubr.f32.mxu0 0.0
        %1703 = vmatmul.mubr.f32.gmra.mrb[0].mxu0 %v1539
        %v1704 = vpop.f32.mrb[0].mxu0
        %v1705 = vadd.f32 0.0, %v1704
        %v1706 = vpop.f32.mrb[0].mxu0
        %1707 = vmatprep.mubr.f32.mxu0 0.0
        %1708 = vmatmul.mubr.f32.gmra.mrb[0].mxu0 %v1542
        %v1709 = vpop.f32.mrb[0].mxu0
        %v1710 = vadd.f32 0.0, %v1709
        %v1711 = vpop.f32.mrb[0].mxu0
        %1712 = vmatprep.mubr.f32.mxu0 0.0
        %1713 = vmatmul.mubr.f32.gmra.mrb[0].mxu0 %v1545
        %v1714 = vpop.f32.mrb[0].mxu0
        %v1715 = vadd.f32 0.0, %v1714
        %v1716 = vpop.f32.mrb[0].mxu0
        %1717 = vmatprep.mubr.f32.mxu0 0.0
        %1718 = vmatmul.mubr.f32.gmra.mrb[0].mxu0 %v1548
        %v1719 = vpop.f32.mrb[0].mxu0
        %v1720 = vadd.f32 0.0, %v1719
        %v1721 = vpop.f32.mrb[0].mxu0
        %1722 = vmatprep.mubr.f32.mxu0 0.0
        %1723 = vmatmul.mubr.f32.gmra.mrb[0].mxu0 %v1551
        %v1724 = vpop.f32.mrb[0].mxu0
        %v1725 = vadd.f32 0.0, %v1724
        %v1726 = vpop.f32.mrb[0].mxu0
        %1727 = vmatprep.mubr.f32.mxu0 0.0
        %1728 = vmatmul.mubr.f32.gmra.mrb[0].mxu0 %v1554
        %v1729 = vpop.f32.mrb[0].mxu0
        %v1730 = vadd.f32 0.0, %v1729
        %v1731 = vpop.f32.mrb[0].mxu0
        %1732 = vmatprep.mubr.f32.mxu0 0.0
        %1733 = vmatmul.mubr.f32.gmra.mrb[0].mxu0 %v1557
        %v1734 = vpop.f32.mrb[0].mxu0
        %v1735 = vadd.f32 0.0, %v1734
        %v1736 = vpop.f32.mrb[0].mxu0
        %1737 = vmatprep.mubr.f32.mxu0 0.0
        %1738 = vmatmul.mubr.f32.gmra.mrb[0].mxu0 %v1560
        %v1739 = vpop.f32.mrb[0].mxu0
        %v1740 = vadd.f32 0.0, %v1739
        %v1741 = vpop.f32.mrb[0].mxu0
        %1742 = vmatprep.mubr.f32.mxu0 0.0
        %1743 = vmatmul.mubr.f32.gmra.mrb[0].mxu0 %v1563
        %v1744 = vpop.f32.mrb[0].mxu0
        %v1745 = vadd.f32 0.0, %v1744
        %v1746 = vpop.f32.mrb[0].mxu0
        %1747 = vmatprep.mubr.f32.mxu0 0.0
        %1748 = vmatmul.mubr.f32.gmra.mrb[0].mxu0 %v1566
        %v1749 = vpop.f32.mrb[0].mxu0
        %v1750 = vadd.f32 0.0, %v1749
        %v1751 = vpop.f32.mrb[0].mxu0
        %1752 = vmatprep.mubr.f32.mxu0 0.0
        %1753 = vmatmul.mubr.f32.gmra.mrb[0].mxu0 %v1569
        %v1754 = vpop.f32.mrb[0].mxu0
        %v1755 = vadd.f32 0.0, %v1754
        %v1756 = vpop.f32.mrb[0].mxu0
        %1757 = vmatprep.mubr.f32.mxu0 0.0
        %1758 = vmatmul.mubr.f32.gmra.mrb[0].mxu0 %v1572
        %v1759 = vpop.f32.mrb[0].mxu0
        %v1760 = vadd.f32 0.0, %v1759
        %v1761 = vpop.f32.mrb[0].mxu0
        %1762 = vmatprep.mubr.f32.mxu0 0.0
        %1763 = vmatmul.mubr.f32.gmra.mrb[0].mxu0 %v1575
        %v1764 = vpop.f32.mrb[0].mxu0
        %v1765 = vadd.f32 0.0, %v1764
        %v1766 = vpop.f32.mrb[0].mxu0
        %1767 = vmatprep.mubr.f32.mxu0 0.0
        %1768 = vmatmul.mubr.f32.gmra.mrb[0].mxu0 %v1578
        %v1769 = vpop.f32.mrb[0].mxu0
        %v1770 = vadd.f32 0.0, %v1769
        %v1771 = vpop.f32.mrb[0].mxu0
        %1772 = vmatprep.mubr.f32.mxu0 0.0
        %1773 = vmatmul.mubr.f32.gmra.mrb[0].mxu0 %v1581
        %v1774 = vpop.f32.mrb[0].mxu0
        %v1775 = vadd.f32 0.0, %v1774
        %v1776 = vpop.f32.mrb[0].mxu0
        %1777 = vmatprep.mubr.f32.mxu0 0.0
        %1778 = vmatmul.mubr.f32.gmra.mrb[0].mxu0 %v1584
        %v1779 = vpop.f32.mrb[0].mxu0
        %v1780 = vadd.f32 0.0, %v1779
        %v1781 = vpop.f32.mrb[0].mxu0
        %1782 = vmatprep.mubr.f32.mxu0 0.0
        %1783 = vmatmul.mubr.f32.gmra.mrb[0].mxu0 %v1587
        %v1784 = vpop.f32.mrb[0].mxu0
        %v1785 = vadd.f32 0.0, %v1784
        %v1786 = vpop.f32.mrb[0].mxu0
        %1787 = vmatprep.mubr.f32.mxu0 0.0
        %1788 = vmatmul.mubr.f32.gmra.mrb[0].mxu0 %v1590
        %v1789 = vpop.f32.mrb[0].mxu0
        %v1790 = vadd.f32 0.0, %v1789
        %v1791 = vpop.f32.mrb[0].mxu0
        %1792 = vmatprep.mubr.f32.mxu0 0.0
        %1793 = vmatmul.mubr.f32.gmra.mrb[0].mxu0 %v1593
        %v1794 = vpop.f32.mrb[0].mxu0
        %v1795 = vadd.f32 0.0, %v1794
        %v1796 = vpop.f32.mrb[0].mxu0
        %1797 = vmatprep.mubr.f32.mxu0 0.0
        %1798 = vmatmul.mubr.f32.gmra.mrb[0].mxu0 %v1596
        %v1799 = vpop.f32.mrb[0].mxu0
        %v1800 = vadd.f32 0.0, %v1799
        %v1801 = vpop.f32.mrb[0].mxu0
        %1802 = vmatprep.mubr.f32.mxu0 0.0
        %1803 = vmatmul.mubr.f32.gmra.mrb[0].mxu0 %v1599
        %v1804 = vpop.f32.mrb[0].mxu0
        %v1805 = vadd.f32 0.0, %v1804
        %v1806 = vpop.f32.mrb[0].mxu0
        %1807 = vmatprep.mubr.f32.mxu0 0.0
        %1808 = vmatmul.mubr.f32.gmra.mrb[0].mxu0 %v1602
        %v1809 = vpop.f32.mrb[0].mxu0
        %v1810 = vadd.f32 0.0, %v1809
        %v1811 = vpop.f32.mrb[0].mxu0
        %1812 = vmatprep.mubr.f32.mxu0 0.0
        %1813 = vmatmul.mubr.f32.gmra.mrb[0].mxu0 %v1605
        %v1814 = vpop.f32.mrb[0].mxu0
        %v1815 = vadd.f32 0.0, %v1814
        %v1816 = vpop.f32.mrb[0].mxu0
        %1817 = vmatprep.mubr.f32.mxu0 0.0
        %1818 = vmatmul.mubr.f32.gmra.mrb[0].mxu0 %v1608
        %v1819 = vpop.f32.mrb[0].mxu0
        %v1820 = vadd.f32 0.0, %v1819
        %v1821 = vpop.f32.mrb[0].mxu0
        %1822 = vmatprep.mubr.f32.mxu0 0.0
        %1823 = vmatmul.mubr.f32.gmra.mrb[0].mxu0 %v1611
        %v1824 = vpop.f32.mrb[0].mxu0
        %v1825 = vadd.f32 0.0, %v1824
        %v1826 = vpop.f32.mrb[0].mxu0
        %1827 = vmatprep.mubr.f32.mxu0 0.0
        %1828 = vmatmul.mubr.f32.gmra.mrb[0].mxu0 %v1614
        %v1829 = vpop.f32.mrb[0].mxu0
        %v1830 = vadd.f32 0.0, %v1829
        %v1831 = vpop.f32.mrb[0].mxu0
        %1832 = vmatprep.mubr.f32.mxu0 0.0
        %1833 = vmatmul.mubr.f32.gmra.mrb[0].mxu0 %v1617
        %v1834 = vpop.f32.mrb[0].mxu0
        %v1835 = vadd.f32 0.0, %v1834
        %v1836 = vpop.f32.mrb[0].mxu0
        %1837 = vmatprep.mubr.f32.mxu0 0.0
        %1838 = vmatmul.mubr.f32.gmra.mrb[0].mxu0 %v1620
        %v1839 = vpop.f32.mrb[0].mxu0
        %v1840 = vadd.f32 0.0, %v1839
        %v1841 = vpop.f32.mrb[0].mxu0
        %1842 = vmatprep.mubr.f32.mxu0 0.0
        %1843 = vmatmul.mubr.f32.gmra.mrb[0].mxu0 %v1623
        %v1844 = vpop.f32.mrb[0].mxu0
        %v1845 = vadd.f32 0.0, %v1844
        %v1846 = vpop.f32.mrb[0].mxu0
        %1847 = vmatprep.mubr.f32.mxu0 0.0
        %1848 = vmatmul.mubr.f32.gmra.mrb[0].mxu0 %v1626
        %v1849 = vpop.f32.mrb[0].mxu0
        %v1850 = vadd.f32 0.0, %v1849
        %v1851 = vpop.f32.mrb[0].mxu0
        %1852 = vdwg.mxu0
        %1853 = vst [vmem:[%s183] sm:$0xff] %v1695
        %1854 = vst [vmem:[%s183 + $0x8] sm:$0xff] %v1700
        %1855 = vst [vmem:[%s183 + $0x10] sm:$0xff] %v1705
        %1856 = vst [vmem:[%s183 + $0x18] sm:$0xff] %v1710
        %1857 = vst [vmem:[%s183 + $0x20] sm:$0xff] %v1715
        %1858 = vst [vmem:[%s183 + $0x28] sm:$0xff] %v1720
        %1859 = vst [vmem:[%s183 + $0x30] sm:$0xff] %v1725
        %1860 = vst [vmem:[%s183 + $0x38] sm:$0xff] %v1730
        %1861 = vst [vmem:[%s183 + $0x40] sm:$0xff] %v1735
        %1862 = vst [vmem:[%s183 + $0x48] sm:$0xff] %v1740
        %1863 = vst [vmem:[%s183 + $0x50] sm:$0xff] %v1745
        %1864 = vst [vmem:[%s183 + $0x58] sm:$0xff] %v1750
        %1865 = vst [vmem:[%s183 + $0x60] sm:$0xff] %v1755
        %1866 = vst [vmem:[%s183 + $0x68] sm:$0xff] %v1760
        %1867 = vst [vmem:[%s183 + $0x70] sm:$0xff] %v1765
        %1868 = vst [vmem:[%s183 + $0x78] sm:$0xff] %v1770
        %1869 = vst [vmem:[%s183 + $0x80] sm:$0xff] %v1775
        %1870 = vst [vmem:[%s183 + $0x88] sm:$0xff] %v1780
        %1871 = vst [vmem:[%s183 + $0x90] sm:$0xff] %v1785
        %1872 = vst [vmem:[%s183 + $0x98] sm:$0xff] %v1790
        %1873 = vst [vmem:[%s183 + $0xa0] sm:$0xff] %v1795
        %1874 = vst [vmem:[%s183 + $0xa8] sm:$0xff] %v1800
        %1875 = vst [vmem:[%s183 + $0xb0] sm:$0xff] %v1805
        %1876 = vst [vmem:[%s183 + $0xb8] sm:$0xff] %v1810
        %1877 = vst [vmem:[%s183 + $0xc0] sm:$0xff] %v1815
        %1878 = vst [vmem:[%s183 + $0xc8] sm:$0xff] %v1820
        %1879 = vst [vmem:[%s183 + $0xd0] sm:$0xff] %v1825
        %1880 = vst [vmem:[%s183 + $0xd8] sm:$0xff] %v1830
        %1881 = vst [vmem:[%s183 + $0xe0] sm:$0xff] %v1835
        %1882 = vst [vmem:[%s183 + $0xe8] sm:$0xff] %v1840
        %1883 = vst [vmem:[%s183 + $0xf0] sm:$0xff] %v1845
        %1884 = vst [vmem:[%s183 + $0xf8] sm:$0xff] %v1850
        %v1885 = vadd.f32 %v1695, %v1700
        %v1886 = vadd.f32 %v1885, %v1705
        %v1887 = vadd.f32 %v1886, %v1710
        %v1888 = vadd.f32 %v1887, %v1715
        %v1889 = vadd.f32 %v1888, %v1720
        %v1890 = vadd.f32 %v1889, %v1725
        %v1891 = vadd.f32 %v1890, %v1730
        %v1892 = vadd.f32 %v1891, %v1735
        %v1893 = vadd.f32 %v1892, %v1740
        %v1894 = vadd.f32 %v1893, %v1745
        %v1895 = vadd.f32 %v1894, %v1750
        %v1896 = vadd.f32 %v1895, %v1755
        %v1897 = vadd.f32 %v1896, %v1760
        %v1898 = vadd.f32 %v1897, %v1765
        %v1899 = vadd.f32 %v1898, %v1770
        %v1900 = vadd.f32 %v1899, %v1775
        %v1901 = vadd.f32 %v1900, %v1780
        %v1902 = vadd.f32 %v1901, %v1785
        %v1903 = vadd.f32 %v1902, %v1790
        %v1904 = vadd.f32 %v1903, %v1795
        %v1905 = vadd.f32 %v1904, %v1800
        %v1906 = vadd.f32 %v1905, %v1805
        %v1907 = vadd.f32 %v1906, %v1810
        %v1908 = vadd.f32 %v1907, %v1815
        %v1909 = vadd.f32 %v1908, %v1820
        %v1910 = vadd.f32 %v1909, %v1825
        %v1911 = vadd.f32 %v1910, %v1830
        %v1912 = vadd.f32 %v1911, %v1835
        %v1913 = vadd.f32 %v1912, %v1840
        %v1914 = vadd.f32 %v1913, %v1845
        %v1915 = vadd.f32 %v1914, %v1850
        %v1916 = vrot.slane %v1915, 4
        %v1917 = vadd.f32 %v1915, %v1916
        %v1918 = vrot.slane %v1917, 2
        %v1919 = vadd.f32 %v1917, %v1918
        %v1920 = vrot.slane %v1919, 1
        %v1921 = vadd.f32 %v1919, %v1920
        %v1922 = vmul.f32 %v1695, %v1695
        %v1923 = vmul.f32 %v1700, %v1700
        %v1924 = vmul.f32 %v1705, %v1705
        %v1925 = vmul.f32 %v1710, %v1710
        %v1926 = vmul.f32 %v1715, %v1715
        %v1927 = vmul.f32 %v1720, %v1720
        %v1928 = vmul.f32 %v1725, %v1725
        %v1929 = vmul.f32 %v1730, %v1730
        %v1930 = vmul.f32 %v1735, %v1735
        %v1931 = vmul.f32 %v1740, %v1740
        %v1932 = vmul.f32 %v1745, %v1745
        %v1933 = vmul.f32 %v1750, %v1750
        %v1934 = vmul.f32 %v1755, %v1755
        %v1935 = vmul.f32 %v1760, %v1760
        %v1936 = vmul.f32 %v1765, %v1765
        %v1937 = vmul.f32 %v1770, %v1770
        %v1938 = vmul.f32 %v1775, %v1775
        %v1939 = vmul.f32 %v1780, %v1780
        %v1940 = vmul.f32 %v1785, %v1785
        %v1941 = vmul.f32 %v1790, %v1790
        %v1942 = vmul.f32 %v1795, %v1795
        %v1943 = vmul.f32 %v1800, %v1800
        %v1944 = vmul.f32 %v1805, %v1805
        %v1945 = vmul.f32 %v1810, %v1810
        %v1946 = vmul.f32 %v1815, %v1815
        %v1947 = vmul.f32 %v1820, %v1820
        %v1948 = vmul.f32 %v1825, %v1825
        %v1949 = vmul.f32 %v1830, %v1830
        %v1950 = vmul.f32 %v1835, %v1835
        %v1951 = vmul.f32 %v1840, %v1840
        %v1952 = vmul.f32 %v1845, %v1845
        %v1953 = vmul.f32 %v1850, %v1850
        %v1954 = vadd.f32 %v1922, %v1923
        %v1955 = vadd.f32 %v1954, %v1924
        %v1956 = vadd.f32 %v1955, %v1925
        %v1957 = vadd.f32 %v1956, %v1926
        %v1958 = vadd.f32 %v1957, %v1927
        %v1959 = vadd.f32 %v1958, %v1928
        %v1960 = vadd.f32 %v1959, %v1929
        %v1961 = vadd.f32 %v1960, %v1930
        %v1962 = vadd.f32 %v1961, %v1931
        %v1963 = vadd.f32 %v1962, %v1932
        %v1964 = vadd.f32 %v1963, %v1933
        %v1965 = vadd.f32 %v1964, %v1934
        %v1966 = vadd.f32 %v1965, %v1935
        %v1967 = vadd.f32 %v1966, %v1936
        %v1968 = vadd.f32 %v1967, %v1937
        %v1969 = vadd.f32 %v1968, %v1938
        %v1970 = vadd.f32 %v1969, %v1939
        %v1971 = vadd.f32 %v1970, %v1940
        %v1972 = vadd.f32 %v1971, %v1941
        %v1973 = vadd.f32 %v1972, %v1942
        %v1974 = vadd.f32 %v1973, %v1943
        %v1975 = vadd.f32 %v1974, %v1944
        %v1976 = vadd.f32 %v1975, %v1945
        %v1977 = vadd.f32 %v1976, %v1946
        %v1978 = vadd.f32 %v1977, %v1947
        %v1979 = vadd.f32 %v1978, %v1948
        %v1980 = vadd.f32 %v1979, %v1949
        %v1981 = vadd.f32 %v1980, %v1950
        %v1982 = vadd.f32 %v1981, %v1951
        %v1983 = vadd.f32 %v1982, %v1952
        %v1984 = vadd.f32 %v1983, %v1953
        %v1985 = vrot.slane %v1984, 4
        %v1986 = vadd.f32 %v1984, %v1985
        %v1987 = vrot.slane %v1986, 2
        %v1988 = vadd.f32 %v1986, %v1987
        %v1989 = vrot.slane %v1988, 1
        %v1990 = vadd.f32 %v1988, %v1989
        %vm1991 = vcmask 1040384
        %v1992 = vsel %vm1991, %v1921, %v1990
        %1993 = vst [vmem:[%s190] sm:$0x3] %v1992
        %s1994 = sand.u32 %s90, 1
        %s1995 = scalar_lea.sflag [#allocation3], %s1994
        %s1996 = sand.u32 %s90, 1
        %s1997 = smul.addr %s1996, 256
        %s1998 = scalar_lea.vmem [#allocation2], %s1997
        %s1999 = sand.u32 %s118, 1
        %s2000 = scalar_lea.sflag [#allocation5], %s1999
        %s2001 = sand.u32 %s118, 1
        %s2002 = smul.addr %s2001, 2
        %s2003 = scalar_lea.vmem [#allocation4], %s2002
        // Predicated region
        $region29: #{tpu_custom_call.1} parent=27 // pred_check
          %p2004 = pneg %p100
        $region30: #{tpu_custom_call.1} parent=27 // pred_check_branch
          %2006 = sbr.rel (%p2004) target = $region32
        $region31: #{tpu_custom_call.1} parent=27 // pred_region
          %s2007 = smul.u32 16, %s26
          %s2009 = ssub.s32 4096, 4096
          %2010 = vsyncadd %s1995, %s2009
          %s2011 = smul.addr %s2007, 2
          %s2012 = smul.addr %s25, 32
          %s2013 = sadd.s32 %s2011, %s2012
          %s2014 = smul.addr %s2013, 128
          %s2015 = scalar_lea.hbm %s2, %s2014
          %s2016 = sshll.u32 %s1998, 4
          %s2017 = int_to_ptr.vmem [resolvable:$true] %s2016
          %2022 = dma.vmem_to_hbm [thread:$0]  %s2017, 4096, %s2015, %s1995, 128, 128, 8
        $region32: #{tpu_custom_call.1} parent=27 // pred_fallthru
          _
        // Predicated region
        $region33: #{tpu_custom_call.1} parent=27 // pred_check
          %p2023 = pneg %p128
        $region34: #{tpu_custom_call.1} parent=27 // pred_check_branch
          %2025 = sbr.rel (%p2023) target = $region36
        $region35: #{tpu_custom_call.1} parent=27 // pred_region
          %s2027 = ssub.s32 32, 32
          %2028 = vsyncadd %s2000, %s2027
          %s2029 = sadd.s32 %s26, %s25
          %s2030 = smul.addr %s2029, 32
          %s2031 = scalar_lea.hbm %s3, %s2030
          %s2033 = sshll.u32 %s2003, 4
          %s2034 = int_to_ptr.vmem [resolvable:$true] %s2033
          %2036 = dma.vmem_to_hbm [thread:$0]  %s2034, 32, %s2031, %s2000
        $region36: #{tpu_custom_call.1} parent=27 // pred_fallthru
          _
      $region28: #{tpu_custom_call.1} parent=5 // pred_fallthru
        _
      %p2037 = scmp.le.s32.totalorder 2, %s16
      // Predicated region
      $region37: #{tpu_custom_call.1} parent=5 // pred_check
        %p2038 = pneg %p2037
      $region38: #{tpu_custom_call.1} parent=5 // pred_check_branch
        %2040 = sbr.rel (%p2038) target = $region40
      $region39: #{tpu_custom_call.1} parent=5 // pred_region
        %s2041 = ssub.s32 %s16, 2
        // Predicated region
        $region41: #{tpu_custom_call.1} parent=39 // pred_check
          %p2042 = pneg %p106
        $region42: #{tpu_custom_call.1} parent=39 // pred_check_branch
          %2044 = sbr.rel (%p2042) target = $region44
        $region43: #{tpu_custom_call.1} parent=39 // pred_region
          %s2045 = sand.u32 %s91, 1
          %s2046 = scalar_lea.sflag [#allocation3], %s2045
          %s2047 = sand.u32 %s91, 1
          %s2048 = smul.addr %s2047, 256
          %s2049 = scalar_lea.vmem [#allocation2], %s2048
          %2050 = dma.done %s2046, 4096
        $region44: #{tpu_custom_call.1} parent=39 // pred_fallthru
          _
        // Predicated region
        $region45: #{tpu_custom_call.1} parent=39 // pred_check
          %p2051 = pneg %p134
        $region46: #{tpu_custom_call.1} parent=39 // pred_check_branch
          %2053 = sbr.rel (%p2051) target = $region48
        $region47: #{tpu_custom_call.1} parent=39 // pred_region
          %s2054 = sand.u32 %s119, 1
          %s2055 = scalar_lea.sflag [#allocation5], %s2054
          %s2056 = sand.u32 %s119, 1
          %s2057 = smul.addr %s2056, 2
          %s2058 = scalar_lea.vmem [#allocation4], %s2057
          %2059 = dma.done %s2055, 32
        $region48: #{tpu_custom_call.1} parent=39 // pred_fallthru
          _
      $region40: #{tpu_custom_call.1} parent=5 // pred_fallthru
        _
    $region6: #{tpu_custom_call.1} parent=1 // loop_footer
      %s20 = sadd.s32 1, %s16
    $region7: #{tpu_custom_call.1} parent=1 // loop_footer_branch
      %15 = sbr.rel target = $region3
    $region8: #{tpu_custom_call.1} parent=1 // loop_exit
      _
    %2060 = vsyncpa [#allocation3], 1
    %s2061 = scalar_lea.sflag [#allocation3], 1
    %2062 = vsyncpa %s2061, 1
    %2063 = vsyncpa [#allocation5], 1
    %s2064 = scalar_lea.sflag [#allocation5], 1
    %2065 = vsyncpa %s2064, 1

</llo_original>
